<compile_context>
chip_gen: v6e
topology: v6e:2x2x1
jax: 0.10.0
libtpu: 0.0.40
codegen_flags: <defaults>
</compile_context>

<pallas_src>
import numpy as np
import jax
import jax.numpy as jnp
from jax.experimental import pallas as pl
from jax.experimental.pallas import tpu as pltpu

# ----------------------------- configuration -----------------------------
WIN_LEN = 16
WIN_INC = 8
FFT_LEN = WIN_LEN
NFREQ = FFT_LEN // 2 + 1          # N  = 9
F2 = 2 * NFREQ                    # 2N = 18
BDIM = 16                         # bottleneck B
HDIM = 16                         # GRU hidden H
LN_EPS = 1e-5                     # gLN eps
MAG_EPS = 1e-8                    # torch: sqrt(re^2 + im^2 + 1e-8)
ISTFT_EPS = 1e-8                  # torch: / (coff + 1e-8)
PHASE_EPS = 1e-12                 # guard for rsqrt in cos/sin ratio


# ------------------------------ fused kernel ------------------------------
def esnet_fused_kernel(mic_ref, far_ref, stftw_ref, istftw_ref, icoff_ref,
                       wpack_ref, vcol_ref, vrow_ref,
                       out_ref, gi_ref, gru_ref):
    # Per grid step: one batch element, everything channel-first (C, T).
    T = mic_ref.shape[2]
    H = HDIM
    N = NFREQ

    mic_fr = mic_ref[0]                      # (16, T)  framed signal, cols = frames
    far_fr = far_ref[0]                      # (16, T)
    stft_w = stftw_ref[...]                  # (18, 16)

    # ---- ConvSTFT: spec = basis @ frames  -> lane-dense (2N, T) ------------
    mic_spec = jnp.dot(stft_w, mic_fr, preferred_element_type=jnp.float32)
    far_spec = jnp.dot(stft_w, far_fr, preferred_element_type=jnp.float32)

    mic_r = mic_spec[:N, :]
    mic_i = mic_spec[N:, :]
    far_r = far_spec[:N, :]
    far_i = far_spec[N:, :]

    mic_pow = mic_r * mic_r + mic_i * mic_i
    mic_mag = jnp.sqrt(mic_pow + MAG_EPS)
    far_mag = jnp.sqrt(far_r * far_r + far_i * far_i + MAG_EPS)

    vcol = vcol_ref[...]                     # (18, 8)   column-style params
    vrow = vrow_ref[...]                     # (3, 128)  row-style GRU biases

    # ---- inputs + gLN1 (one-pass stats, rsqrt) -----------------------------
    x = jnp.concatenate([mic_mag, far_mag], axis=0)          # (18, T)
    n_el = x.shape[0] * x.shape[1]
    s1 = jnp.sum(x)
    ss1 = jnp.sum(x * x)
    mean1 = s1 / n_el
    var1 = ss1 / n_el - mean1 * mean1
    istd1 = jax.lax.rsqrt(var1 + LN_EPS)
    g1 = vcol[:, 0:1]
    b1 = vcol[:, 1:2]
    x = g1 * ((x - mean1) * istd1) + b1

    # ---- proj: Conv1d(2N, B, 1) --------------------------------------------
    wp = wpack_ref[0][:, :F2]                                # (16, 18)
    bp = vcol[:BDIM, 2:3]                                    # (16, 1)
    w = jnp.dot(wp, x, preferred_element_type=jnp.float32) + bp   # (16, T)

    # ---- gLN2 ---------------------------------------------------------------
    n_el2 = w.shape[0] * w.shape[1]
    s2 = jnp.sum(w)
    ss2 = jnp.sum(w * w)
    mean2 = s2 / n_el2
    var2 = ss2 / n_el2 - mean2 * mean2
    istd2 = jax.lax.rsqrt(var2 + LN_EPS)
    g2 = vcol[:BDIM, 3:4]
    b2 = vcol[:BDIM, 4:5]
    w = g2 * ((w - mean2) * istd2) + b2

    # ---- proj2: Conv1d(B, B, 3, padding=1) as one (16,48)@(48,T) matmul -----
    zcol = jnp.zeros((BDIM, 1), jnp.float32)
    w_prev = jnp.concatenate([zcol, w[:, :T - 1]], axis=1)   # x_{t-1}
    w_next = jnp.concatenate([w[:, 1:], zcol], axis=1)       # x_{t+1}
    xcat = jnp.concatenate([w_prev, w, w_next], axis=0)      # (48, T)
    wc = wpack_ref[1][:, :48]                                # (16, 48)
    bc = vcol[:BDIM, 5:6]
    w = jnp.dot(wc, xcat, preferred_element_type=jnp.float32) + bc   # (16, T)

    # ---- GRU layer-0 input gates for all steps (one batched matmul) ---------
    w_rows = w.T                                             # (T, 16)
    wih0T = wpack_ref[2][:, :48]                             # (16, 48)
    bih0 = vrow[0:1, :48]                                    # (1, 48)
    gi_ref[...] = (jnp.dot(w_rows, wih0T, preferred_element_type=jnp.float32)
                   + bih0)                                   # (T, 48)

    # ---- 2-layer GRU recurrence (PyTorch gate order r,z,n; h0 = 0) ----------
    # whh0 and wih1 are fused into one (16,96) matmul on h0 via pipelining:
    # step t produces gi1_t and gh0_{t+1} together.
    wf = wpack_ref[3][:, :96]                                # [whh0^T | wih1^T]
    whh1T = wpack_ref[4][:, :48]
    bf = vrow[1:2, :96]                                      # [bhh0 | bih1]
    bhh1 = vrow[2:3, :48]

    def gru_step(t, carry):
        h0, h1, gh0 = carry
        gi0 = gi_ref[pl.ds(t, 1), :]                         # (1, 48)
        r0 = jax.nn.sigmoid(gi0[:, 0:H] + gh0[:, 0:H])
        z0 = jax.nn.sigmoid(gi0[:, H:2 * H] + gh0[:, H:2 * H])
        n0 = jnp.tanh(gi0[:, 2 * H:3 * H] + r0 * gh0[:, 2 * H:3 * H])
        h0 = (1.0 - z0) * n0 + z0 * h0

        fused = jnp.dot(h0, wf, preferred_element_type=jnp.float32) + bf  # (1,96)
        gh0_next = fused[:, 0:3 * H]                         # for step t+1
        gi1 = fused[:, 3 * H:6 * H]                          # for this step

        gh1 = jnp.dot(h1, whh1T, preferred_element_type=jnp.float32) + bhh1
        r1 = jax.nn.sigmoid(gi1[:, 0:H] + gh1[:, 0:H])
        z1 = jax.nn.sigmoid(gi1[:, H:2 * H] + gh1[:, H:2 * H])
        n1 = jnp.tanh(gi1[:, 2 * H:3 * H] + r1 * gh1[:, 2 * H:3 * H])
        h1 = (1.0 - z1) * n1 + z1 * h1

        gru_ref[pl.ds(t, 1), :] = h1
        return h0, h1, gh0_next

    zero_h = jnp.zeros((1, H), jnp.float32)
    jax.lax.fori_loop(0, T, gru_step, (zero_h, zero_h, bf[:, 0:3 * H]))

    # ---- proj_out + sigmoid mask (lane-dense (N, T)) -------------------------
    gru_cols = gru_ref[...].T                                # (16, T)
    wo = wpack_ref[5][:N, :H]                                # (9, 16)
    bo = vcol[:N, 6:7]                                       # (9, 1)
    weight = jax.nn.sigmoid(
        jnp.dot(wo, gru_cols, preferred_element_type=jnp.float32) + bo)  # (9, T)

    # ---- complex masking; cos/sin computed algebraically (no atan2) ----------
    inv_mag = jax.lax.rsqrt(mic_pow + PHASE_EPS)             # 1/sqrt(re^2+im^2)
    scale = weight * mic_mag * inv_mag                       # weight * |S|_eps / |S|
    out_real = scale * mic_r
    out_imag = scale * mic_i
    out_spec = jnp.concatenate([out_real, out_imag], axis=0)  # (18, T)

    # ---- ConviSTFT: frames + vectorized overlap-add + 1/coff ----------------
    frames = jnp.dot(istftw_ref[...], out_spec,
                     preferred_element_type=jnp.float32)     # (16, T)
    top = frames[:WIN_INC, :]                                # contributes to seg s
    bot = frames[WIN_INC:, :]                                # contributes to seg s+1
    zhop = jnp.zeros((WIN_INC, 1), jnp.float32)
    seg = (jnp.concatenate([zhop, bot], axis=1) +
           jnp.concatenate([top, zhop], axis=1))             # (8, T+1) lane-dense
    out_ref[0] = seg * icoff_ref[...]                        # multiply by 1/(coff+eps)


def esnet_fused(mic_fr, far_fr, stft_w, istft_w, inv_coff, wpack, vcol, vrow):
    Bt, W, T = mic_fr.shape

    def batch_map(b):
        return (b, 0, 0)

    def const2(b):
        return (0, 0)

    def const3(b):
        return (0, 0, 0)

    # TODO(synk): for very long sequences, tile T via BlockSpec (two-pass gLN
    # stats + GRU state carried in scratch) so tiles stay within v7x's 64 MiB VMEM.
    return pl.pallas_call(
        esnet_fused_kernel,
        out_shape=jax.ShapeDtypeStruct((Bt, WIN_INC, T + 1), jnp.float32),
        grid_spec=pltpu.PrefetchScalarGridSpec(
            num_scalar_prefetch=0,
            grid=(Bt,),
            in_specs=[
                pl.BlockSpec((1, W, T), batch_map),          # mic frames
                pl.BlockSpec((1, W, T), batch_map),          # far frames
                pl.BlockSpec((F2, WIN_LEN), const2),         # STFT basis
                pl.BlockSpec((WIN_LEN, F2), const2),         # iSTFT basis^T
                pl.BlockSpec((WIN_INC, T + 1), const2),      # 1/(coff+eps)
                pl.BlockSpec((6, BDIM, 128), const3),        # packed weights
                pl.BlockSpec((F2, 8), const2),               # packed column params
                pl.BlockSpec((3, 128), const2),              # packed GRU bias rows
            ],
            out_specs=pl.BlockSpec((1, WIN_INC, T + 1), batch_map),
            scratch_shapes=[pltpu.VMEM((T, 3 * HDIM), jnp.float32),   # gi layer-0
                            pltpu.VMEM((T, HDIM), jnp.float32)],      # GRU outputs
        ),
        compiler_params=pltpu.CompilerParams(
            dimension_semantics=("parallel",)),
    )(mic_fr, far_fr, stft_w, istft_w, inv_coff, wpack, vcol, vrow)


# -------------------------- ConvSTFT basis (numpy) --------------------------
def build_stft_basis():
    n = np.arange(WIN_LEN)
    window = (0.5 - 0.5 * np.cos(2.0 * np.pi * n / WIN_LEN)) ** 0.5   # sqrt(hann)
    fourier = np.fft.rfft(np.eye(FFT_LEN))[:WIN_LEN]                  # (16, 9)
    kernel = np.concatenate([np.real(fourier), np.imag(fourier)], axis=1).T  # (18,16)
    fwd = (kernel * window).astype(np.float32)                        # (2N, W)
    inv = (np.linalg.pinv(kernel).T * window).astype(np.float32)      # (2N, W)
    return fwd, inv, window.astype(np.float32)


def build_inv_coff(window, num_frames):
    """1/(overlap-added window^2 + eps), laid out (8, T+1) to match the kernel."""
    l_full = WIN_INC * (num_frames + 1)
    wsq = window.astype(np.float64) ** 2
    coff = np.zeros(l_full, np.float64)
    for t in range(num_frames):
        coff[t * WIN_INC:t * WIN_INC + WIN_LEN] += wsq
    inv = 1.0 / (coff + ISTFT_EPS)
    return inv.reshape(num_frames + 1, WIN_INC).T.astype(np.float32)  # (8, T+1)


# ------------------------------ parameters ----------------------------------
def init_params(key):
    ks = jax.random.split(key, 14)

    def rn(k, shape, scale=0.1):
        return scale * jax.random.normal(k, shape, jnp.float32)

    p = {
        'ln_gamma': jnp.ones((F2,), jnp.float32),
        'ln_beta': jnp.zeros((F2,), jnp.float32),
        'proj_w': rn(ks[0], (BDIM, F2)),            # Conv1d(2N,B,1) weight (out,in)
        'proj_b': rn(ks[1], (BDIM,)),
        'ln2_gamma': jnp.ones((BDIM,), jnp.float32),
        'ln2_beta': jnp.zeros((BDIM,), jnp.float32),
        'proj2_w': rn(ks[2], (BDIM, BDIM, 3)),      # Conv1d(B,B,3) weight (out,in,k)
        'proj2_b': rn(ks[3], (BDIM,)),
        'wih0': rn(ks[4], (3 * HDIM, BDIM)),        # GRU l0
        'whh0': rn(ks[5], (3 * HDIM, HDIM)),
        'bih0': rn(ks[6], (3 * HDIM,)),
        'bhh0': rn(ks[7], (3 * HDIM,)),
        'wih1': rn(ks[8], (3 * HDIM, HDIM)),        # GRU l1
        'whh1': rn(ks[9], (3 * HDIM, HDIM)),
        'bih1': rn(ks[10], (3 * HDIM,)),
        'bhh1': rn(ks[11], (3 * HDIM,)),
        'out_w': rn(ks[12], (NFREQ, HDIM)),         # Conv1d(H,N,1) weight (out,in)
        'out_b': rn(ks[13], (NFREQ,)),
    }
    return p


def pack_params(p):
    """Pack the 18 small parameter tensors into 3 VMEM-friendly buffers."""
    wpack = jnp.zeros((6, BDIM, 128), jnp.float32)
    wpack = wpack.at[0, :, :F2].set(p['proj_w'])                          # (16,18)
    wc = jnp.concatenate([p['proj2_w'][:, :, k] for k in range(3)], axis=1)
    wpack = wpack.at[1, :, :48].set(wc)                                   # (16,48)
    wpack = wpack.at[2, :, :48].set(p['wih0'].T)                          # (16,48)
    wpack = wpack.at[3, :, :96].set(
        jnp.concatenate([p['whh0'].T, p['wih1'].T], axis=1))              # (16,96)
    wpack = wpack.at[4, :, :48].set(p['whh1'].T)                          # (16,48)
    wpack = wpack.at[5, :NFREQ, :HDIM].set(p['out_w'])                    # (9,16)

    vcol = jnp.zeros((F2, 8), jnp.float32)
    vcol = vcol.at[:, 0].set(p['ln_gamma'])
    vcol = vcol.at[:, 1].set(p['ln_beta'])
    vcol = vcol.at[:BDIM, 2].set(p['proj_b'])
    vcol = vcol.at[:BDIM, 3].set(p['ln2_gamma'])
    vcol = vcol.at[:BDIM, 4].set(p['ln2_beta'])
    vcol = vcol.at[:BDIM, 5].set(p['proj2_b'])
    vcol = vcol.at[:NFREQ, 6].set(p['out_b'])

    vrow = jnp.zeros((3, 128), jnp.float32)
    vrow = vrow.at[0, :48].set(p['bih0'])
    vrow = vrow.at[1, :96].set(jnp.concatenate([p['bhh0'], p['bih1']]))
    vrow = vrow.at[2, :48].set(p['bhh1'])
    return wpack, vcol, vrow


# -------------------------------- forward -----------------------------------
def forward(x, packed, stft_fwd, stft_inv, window):
    mic = x[0].astype(jnp.float32)
    far = x[1].astype(jnp.float32)
    bat = mic.shape[0]
    org_len = mic.shape[1]

    if org_len % WIN_INC != 0:
        pad_len = int(np.ceil(org_len / WIN_INC) * WIN_INC - org_len)
        mic = jnp.pad(mic, ((0, 0), (0, pad_len)))
        far = jnp.pad(far, ((0, 0), (0, pad_len)))

    # ConvSTFT pads (win_len - win_inc) on both sides, frames with hop win_inc.
    edge = WIN_LEN - WIN_INC
    mic_p = jnp.pad(mic, ((0, 0), (edge, edge)))
    far_p = jnp.pad(far, ((0, 0), (edge, edge)))
    L = mic_p.shape[1]
    T = (L - WIN_LEN) // WIN_INC + 1

    # Frames built directly in lane-dense (W, T) layout: fr[b, j, t] = sig[b, t*hop+j]
    def frame_cols(sig):
        stop_base = WIN_INC * (T - 1) + 1
        cols = [sig[:, j:j + stop_base:WIN_INC] for j in range(WIN_LEN)]
        return jnp.stack(cols, axis=1)                       # (Bt, 16, T)

    mic_fr = frame_cols(mic_p)
    far_fr = frame_cols(far_p)

    inv_coff = jnp.asarray(build_inv_coff(window, T))        # (8, T+1)
    stft_w = jnp.asarray(stft_fwd)                           # (18, 16)
    istft_w = jnp.asarray(stft_inv.T)                        # (16, 18)
    wpack, vcol, vrow = packed

    out = esnet_fused(mic_fr, far_fr, stft_w, istft_w, inv_coff,
                      wpack, vcol, vrow)                     # (Bt, 8, T+1)

    # layout plumbing: (Bt, 8, T+1) -> (Bt, L_full), trim ConvSTFT edge pad
    wav_full = jnp.transpose(out, (0, 2, 1)).reshape(bat, WIN_INC * (T + 1))
    wav = wav_full[:, edge:wav_full.shape[1] - edge]
    return [wav.reshape(bat, org_len, -1)]


# ---------------------------------- main -------------------------------------
if __name__ == "__main__":
    key = jax.random.PRNGKey(0)
    k_mic, k_far, k_par = jax.random.split(key, 3)

    batch = 2
    org_len = 512                                             # multiple of win_inc
    mic = jax.random.normal(k_mic, (batch, org_len), jnp.float32)
    far = jax.random.normal(k_far, (batch, org_len), jnp.float32)

    params = init_params(k_par)
    packed = pack_params(params)
    stft_fwd, stft_inv, window = build_stft_basis()

    out = forward([mic, far], packed, stft_fwd, stft_inv, window)
    out0 = jax.block_until_ready(out[0])
    assert out0.shape == (batch, org_len, 1), out0.shape
    assert bool(jnp.all(jnp.isfinite(out0)))
    print("KERNEL_OK")
</pallas_src>

<mosaic_0001>
module attributes {stable_mosaic.version = 11 : i64} {
  func.func @esnet_fused_kernel(%arg0: i32, %arg1: memref<1x16x65xf32, #tpu.memory_space<vmem>>, %arg2: memref<1x16x65xf32, #tpu.memory_space<vmem>>, %arg3: memref<18x16xf32, #tpu.memory_space<vmem>>, %arg4: memref<16x18xf32, #tpu.memory_space<vmem>>, %arg5: memref<8x66xf32, #tpu.memory_space<vmem>>, %arg6: memref<6x16x128xf32, #tpu.memory_space<vmem>>, %arg7: memref<18x8xf32, #tpu.memory_space<vmem>>, %arg8: memref<3x128xf32, #tpu.memory_space<vmem>>, %arg9: memref<1x8x66xf32, #tpu.memory_space<vmem>>, %arg10: memref<65x48xf32, #tpu.memory_space<vmem>>, %arg11: memref<65x16xf32, #tpu.memory_space<vmem>>) attributes {dimension_semantics = [#tpu.dimension_semantics<parallel>], iteration_bounds = array<i64: 2>, scalar_prefetch = 0 : i64, scratch_operands = 2 : i64, tpu.core_type = #tpu.core_type<tc>, window_params = [{transform_indices = @transform_0, window_bounds = array<i64: 1, 16, 65>}, {transform_indices = @transform_1, window_bounds = array<i64: 1, 16, 65>}, {pipeline_mode = #tpu.pipeline_mode<synchronous>, transform_indices = @transform_2, window_bounds = array<i64: 18, 16>}, {pipeline_mode = #tpu.pipeline_mode<synchronous>, transform_indices = @transform_3, window_bounds = array<i64: 16, 18>}, {pipeline_mode = #tpu.pipeline_mode<synchronous>, transform_indices = @transform_4, window_bounds = array<i64: 8, 66>}, {pipeline_mode = #tpu.pipeline_mode<synchronous>, transform_indices = @transform_5, window_bounds = array<i64: 6, 16, 128>}, {pipeline_mode = #tpu.pipeline_mode<synchronous>, transform_indices = @transform_6, window_bounds = array<i64: 18, 8>}, {pipeline_mode = #tpu.pipeline_mode<synchronous>, transform_indices = @transform_7, window_bounds = array<i64: 3, 128>}, {transform_indices = @transform_8, window_bounds = array<i64: 1, 8, 66>}]} {
    %c0 = arith.constant 0 : index
    %c0_0 = arith.constant 0 : index
    %c0_1 = arith.constant 0 : index
    %0 = vector.load %arg1[%c0, %c0_0, %c0_1] : memref<1x16x65xf32, #tpu.memory_space<vmem>>, vector<1x16x65xf32>
    %1 = vector.shape_cast %0 : vector<1x16x65xf32> to vector<16x65xf32>
    %c0_2 = arith.constant 0 : index
    %c0_3 = arith.constant 0 : index
    %c0_4 = arith.constant 0 : index
    %2 = vector.load %arg2[%c0_2, %c0_3, %c0_4] : memref<1x16x65xf32, #tpu.memory_space<vmem>>, vector<1x16x65xf32>
    %3 = vector.shape_cast %2 : vector<1x16x65xf32> to vector<16x65xf32>
    %c0_5 = arith.constant 0 : index
    %c0_6 = arith.constant 0 : index
    %4 = vector.load %arg3[%c0_5, %c0_6] : memref<18x16xf32, #tpu.memory_space<vmem>>, vector<18x16xf32>
    %cst = arith.constant dense<0.000000e+00> : vector<18x65xf32>
    %5 = tpu.matmul %4, %1, %cst {dimension_numbers = #tpu.dot_dimension_numbers<[1], [0], [0], [1], [0, 0, 1, 1], [], []>} : vector<18x16xf32>, vector<16x65xf32>, vector<18x65xf32> -> vector<18x65xf32>
    %cst_7 = arith.constant dense<0.000000e+00> : vector<18x65xf32>
    %6 = tpu.matmul %4, %3, %cst_7 {dimension_numbers = #tpu.dot_dimension_numbers<[1], [0], [0], [1], [0, 0, 1, 1], [], []>} : vector<18x16xf32>, vector<16x65xf32>, vector<18x65xf32> -> vector<18x65xf32>
    %7 = vector.extract_strided_slice %5 {offsets = [0, 0], sizes = [9, 65], strides = [1, 1]} : vector<18x65xf32> to vector<9x65xf32>
    %8 = vector.extract_strided_slice %5 {offsets = [9, 0], sizes = [9, 65], strides = [1, 1]} : vector<18x65xf32> to vector<9x65xf32>
    %9 = vector.extract_strided_slice %6 {offsets = [0, 0], sizes = [9, 65], strides = [1, 1]} : vector<18x65xf32> to vector<9x65xf32>
    %10 = vector.extract_strided_slice %6 {offsets = [9, 0], sizes = [9, 65], strides = [1, 1]} : vector<18x65xf32> to vector<9x65xf32>
    %11 = arith.mulf %7, %7 : vector<9x65xf32>
    %12 = arith.mulf %8, %8 : vector<9x65xf32>
    %13 = arith.addf %11, %12 : vector<9x65xf32>
    %cst_8 = arith.constant 9.99999993E-9 : f32
    %14 = vector.broadcast %cst_8 : f32 to vector<9x65xf32>
    %15 = arith.addf %13, %14 : vector<9x65xf32>
    %16 = math.sqrt %15 : vector<9x65xf32>
    %17 = arith.mulf %9, %9 : vector<9x65xf32>
    %18 = arith.mulf %10, %10 : vector<9x65xf32>
    %19 = arith.addf %17, %18 : vector<9x65xf32>
    %cst_9 = arith.constant 9.99999993E-9 : f32
    %20 = vector.broadcast %cst_9 : f32 to vector<9x65xf32>
    %21 = arith.addf %19, %20 : vector<9x65xf32>
    %22 = math.sqrt %21 : vector<9x65xf32>
    %c0_10 = arith.constant 0 : index
    %c0_11 = arith.constant 0 : index
    %23 = vector.load %arg7[%c0_10, %c0_11] : memref<18x8xf32, #tpu.memory_space<vmem>>, vector<18x8xf32>
    %c0_12 = arith.constant 0 : index
    %c0_13 = arith.constant 0 : index
    %24 = vector.load %arg8[%c0_12, %c0_13] : memref<3x128xf32, #tpu.memory_space<vmem>>, vector<3x128xf32>
    %25 = tpu.concatenate %16, %22 in 0 : vector<9x65xf32>, vector<9x65xf32> -> vector<18x65xf32>
    %26 = vector.shape_cast %25 : vector<18x65xf32> to vector<1x18x65xf32>
    %cst_14 = arith.constant dense<0.000000e+00> : vector<1xf32>
    %27 = vector.multi_reduction <add>, %26, %cst_14 [1, 2] : vector<1x18x65xf32> to vector<1xf32>
    %28 = vector.shape_cast %27 : vector<1xf32> to vector<1x1x1xf32>
    %29 = vector.extract %28[0, 0, 0] : f32 from vector<1x1x1xf32>
    %30 = arith.mulf %25, %25 : vector<18x65xf32>
    %31 = vector.shape_cast %30 : vector<18x65xf32> to vector<1x18x65xf32>
    %cst_15 = arith.constant dense<0.000000e+00> : vector<1xf32>
    %32 = vector.multi_reduction <add>, %31, %cst_15 [1, 2] : vector<1x18x65xf32> to vector<1xf32>
    %33 = vector.shape_cast %32 : vector<1xf32> to vector<1x1x1xf32>
    %34 = vector.extract %33[0, 0, 0] : f32 from vector<1x1x1xf32>
    %cst_16 = arith.constant 1.170000e+03 : f32
    %35 = arith.divf %29, %cst_16 : f32
    %cst_17 = arith.constant 1.170000e+03 : f32
    %36 = arith.divf %34, %cst_17 : f32
    %37 = arith.mulf %35, %35 : f32
    %38 = arith.subf %36, %37 : f32
    %cst_18 = arith.constant 9.99999974E-6 : f32
    %39 = arith.addf %38, %cst_18 : f32
    %40 = math.rsqrt %39 : f32
    %41 = vector.extract_strided_slice %23 {offsets = [0, 0], sizes = [18, 1], strides = [1, 1]} : vector<18x8xf32> to vector<18x1xf32>
    %42 = vector.extract_strided_slice %23 {offsets = [0, 1], sizes = [18, 1], strides = [1, 1]} : vector<18x8xf32> to vector<18x1xf32>
    %43 = vector.broadcast %35 : f32 to vector<18x65xf32>
    %44 = arith.subf %25, %43 : vector<18x65xf32>
    %45 = vector.broadcast %40 : f32 to vector<18x65xf32>
    %46 = arith.mulf %44, %45 : vector<18x65xf32>
    %47 = vector.broadcast %41 : vector<18x1xf32> to vector<18x65xf32>
    %48 = arith.mulf %47, %46 : vector<18x65xf32>
    %49 = vector.broadcast %42 : vector<18x1xf32> to vector<18x65xf32>
    %50 = arith.addf %48, %49 : vector<18x65xf32>
    %c0_19 = arith.constant 0 : index
    %c0_20 = arith.constant 0 : index
    %c0_21 = arith.constant 0 : index
    %51 = vector.load %arg6[%c0_19, %c0_20, %c0_21] : memref<6x16x128xf32, #tpu.memory_space<vmem>>, vector<1x16x128xf32>
    %52 = vector.shape_cast %51 : vector<1x16x128xf32> to vector<16x128xf32>
    %53 = vector.extract_strided_slice %52 {offsets = [0, 0], sizes = [16, 18], strides = [1, 1]} : vector<16x128xf32> to vector<16x18xf32>
    %54 = vector.extract_strided_slice %23 {offsets = [0, 2], sizes = [16, 1], strides = [1, 1]} : vector<18x8xf32> to vector<16x1xf32>
    %cst_22 = arith.constant dense<0.000000e+00> : vector<16x65xf32>
    %55 = tpu.matmul %53, %50, %cst_22 {dimension_numbers = #tpu.dot_dimension_numbers<[1], [0], [0], [1], [0, 0, 1, 1], [], []>} : vector<16x18xf32>, vector<18x65xf32>, vector<16x65xf32> -> vector<16x65xf32>
    %56 = vector.broadcast %54 : vector<16x1xf32> to vector<16x65xf32>
    %57 = arith.addf %55, %56 : vector<16x65xf32>
    %58 = vector.shape_cast %57 : vector<16x65xf32> to vector<1x16x65xf32>
    %cst_23 = arith.constant dense<0.000000e+00> : vector<1xf32>
    %59 = vector.multi_reduction <add>, %58, %cst_23 [1, 2] : vector<1x16x65xf32> to vector<1xf32>
    %60 = vector.shape_cast %59 : vector<1xf32> to vector<1x1x1xf32>
    %61 = vector.extract %60[0, 0, 0] : f32 from vector<1x1x1xf32>
    %62 = arith.mulf %57, %57 : vector<16x65xf32>
    %63 = vector.shape_cast %62 : vector<16x65xf32> to vector<1x16x65xf32>
    %cst_24 = arith.constant dense<0.000000e+00> : vector<1xf32>
    %64 = vector.multi_reduction <add>, %63, %cst_24 [1, 2] : vector<1x16x65xf32> to vector<1xf32>
    %65 = vector.shape_cast %64 : vector<1xf32> to vector<1x1x1xf32>
    %66 = vector.extract %65[0, 0, 0] : f32 from vector<1x1x1xf32>
    %cst_25 = arith.constant 1.040000e+03 : f32
    %67 = arith.divf %61, %cst_25 : f32
    %cst_26 = arith.constant 1.040000e+03 : f32
    %68 = arith.divf %66, %cst_26 : f32
    %69 = arith.mulf %67, %67 : f32
    %70 = arith.subf %68, %69 : f32
    %cst_27 = arith.constant 9.99999974E-6 : f32
    %71 = arith.addf %70, %cst_27 : f32
    %72 = math.rsqrt %71 : f32
    %73 = vector.extract_strided_slice %23 {offsets = [0, 3], sizes = [16, 1], strides = [1, 1]} : vector<18x8xf32> to vector<16x1xf32>
    %74 = vector.extract_strided_slice %23 {offsets = [0, 4], sizes = [16, 1], strides = [1, 1]} : vector<18x8xf32> to vector<16x1xf32>
    %75 = vector.broadcast %67 : f32 to vector<16x65xf32>
    %76 = arith.subf %57, %75 : vector<16x65xf32>
    %77 = vector.broadcast %72 : f32 to vector<16x65xf32>
    %78 = arith.mulf %76, %77 : vector<16x65xf32>
    %79 = vector.broadcast %73 : vector<16x1xf32> to vector<16x65xf32>
    %80 = arith.mulf %79, %78 : vector<16x65xf32>
    %81 = vector.broadcast %74 : vector<16x1xf32> to vector<16x65xf32>
    %82 = arith.addf %80, %81 : vector<16x65xf32>
    %cst_28 = arith.constant 0.000000e+00 : f32
    %83 = vector.broadcast %cst_28 : f32 to vector<16x1xf32>
    %84 = vector.extract_strided_slice %82 {offsets = [0, 0], sizes = [16, 64], strides = [1, 1]} : vector<16x65xf32> to vector<16x64xf32>
    %85 = tpu.concatenate %83, %84 in 1 : vector<16x1xf32>, vector<16x64xf32> -> vector<16x65xf32>
    %86 = vector.extract_strided_slice %82 {offsets = [0, 1], sizes = [16, 64], strides = [1, 1]} : vector<16x65xf32> to vector<16x64xf32>
    %87 = tpu.concatenate %86, %83 in 1 : vector<16x64xf32>, vector<16x1xf32> -> vector<16x65xf32>
    %88 = tpu.concatenate %85, %82, %87 in 0 : vector<16x65xf32>, vector<16x65xf32>, vector<16x65xf32> -> vector<48x65xf32>
    %c1 = arith.constant 1 : index
    %c0_29 = arith.constant 0 : index
    %c0_30 = arith.constant 0 : index
    %89 = vector.load %arg6[%c1, %c0_29, %c0_30] : memref<6x16x128xf32, #tpu.memory_space<vmem>>, vector<1x16x128xf32>
    %90 = vector.shape_cast %89 : vector<1x16x128xf32> to vector<16x128xf32>
    %91 = vector.extract_strided_slice %90 {offsets = [0, 0], sizes = [16, 48], strides = [1, 1]} : vector<16x128xf32> to vector<16x48xf32>
    %92 = vector.extract_strided_slice %23 {offsets = [0, 5], sizes = [16, 1], strides = [1, 1]} : vector<18x8xf32> to vector<16x1xf32>
    %cst_31 = arith.constant dense<0.000000e+00> : vector<16x65xf32>
    %93 = tpu.matmul %91, %88, %cst_31 {dimension_numbers = #tpu.dot_dimension_numbers<[1], [0], [0], [1], [0, 0, 1, 1], [], []>} : vector<16x48xf32>, vector<48x65xf32>, vector<16x65xf32> -> vector<16x65xf32>
    %94 = vector.broadcast %92 : vector<16x1xf32> to vector<16x65xf32>
    %95 = arith.addf %93, %94 : vector<16x65xf32>
    %96 = tpu.transpose %95, [1, 0] : vector<16x65xf32> -> vector<65x16xf32>
    %c2 = arith.constant 2 : index
    %c0_32 = arith.constant 0 : index
    %c0_33 = arith.constant 0 : index
    %97 = vector.load %arg6[%c2, %c0_32, %c0_33] : memref<6x16x128xf32, #tpu.memory_space<vmem>>, vector<1x16x128xf32>
    %98 = vector.shape_cast %97 : vector<1x16x128xf32> to vector<16x128xf32>
    %99 = vector.extract_strided_slice %98 {offsets = [0, 0], sizes = [16, 48], strides = [1, 1]} : vector<16x128xf32> to vector<16x48xf32>
    %100 = vector.extract_strided_slice %24 {offsets = [0, 0], sizes = [1, 48], strides = [1, 1]} : vector<3x128xf32> to vector<1x48xf32>
    %cst_34 = arith.constant dense<0.000000e+00> : vector<65x48xf32>
    %101 = tpu.matmul %96, %99, %cst_34 {dimension_numbers = #tpu.dot_dimension_numbers<[1], [0], [0], [1], [0, 0, 1, 1], [], []>} : vector<65x16xf32>, vector<16x48xf32>, vector<65x48xf32> -> vector<65x48xf32>
    %102 = vector.broadcast %100 : vector<1x48xf32> to vector<65x48xf32>
    %103 = arith.addf %101, %102 : vector<65x48xf32>
    %c0_35 = arith.constant 0 : index
    %c0_36 = arith.constant 0 : index
    %104 = vector.load %arg10[%c0_35, %c0_36] : memref<65x48xf32, #tpu.memory_space<vmem>>, vector<65x48xf32>
    tpu.vector_store %arg10[%c0_35, %c0_36], %103 {strides = array<i32>} : memref<65x48xf32, #tpu.memory_space<vmem>>, vector<65x48xf32>,
    %c3 = arith.constant 3 : index
    %c0_37 = arith.constant 0 : index
    %c0_38 = arith.constant 0 : index
    %105 = vector.load %arg6[%c3, %c0_37, %c0_38] : memref<6x16x128xf32, #tpu.memory_space<vmem>>, vector<1x16x128xf32>
    %106 = vector.shape_cast %105 : vector<1x16x128xf32> to vector<16x128xf32>
    %107 = vector.extract_strided_slice %106 {offsets = [0, 0], sizes = [16, 96], strides = [1, 1]} : vector<16x128xf32> to vector<16x96xf32>
    %c4 = arith.constant 4 : index
    %c0_39 = arith.constant 0 : index
    %c0_40 = arith.constant 0 : index
    %108 = vector.load %arg6[%c4, %c0_39, %c0_40] : memref<6x16x128xf32, #tpu.memory_space<vmem>>, vector<1x16x128xf32>
    %109 = vector.shape_cast %108 : vector<1x16x128xf32> to vector<16x128xf32>
    %110 = vector.extract_strided_slice %109 {offsets = [0, 0], sizes = [16, 48], strides = [1, 1]} : vector<16x128xf32> to vector<16x48xf32>
    %111 = vector.extract_strided_slice %24 {offsets = [1, 0], sizes = [1, 96], strides = [1, 1]} : vector<3x128xf32> to vector<1x96xf32>
    %112 = vector.extract_strided_slice %24 {offsets = [2, 0], sizes = [1, 48], strides = [1, 1]} : vector<3x128xf32> to vector<1x48xf32>
    %cst_41 = arith.constant 0.000000e+00 : f32
    %113 = vector.broadcast %cst_41 : f32 to vector<1x16xf32>
    %114 = vector.extract_strided_slice %111 {offsets = [0, 0], sizes = [1, 48], strides = [1, 1]} : vector<1x96xf32> to vector<1x48xf32>
    %c0_i32 = arith.constant 0 : i32
    %c65_i32 = arith.constant 65 : i32
    %115 = arith.addi %c0_i32, %c65_i32 : i32
    %c1_i32 = arith.constant 1 : i32
    %116:3 = scf.for %arg12 = %c0_i32 to %115 step %c1_i32 iter_args(%arg13 = %113, %arg14 = %113, %arg15 = %114) -> (vector<1x16xf32>, vector<1x16xf32>, vector<1x48xf32>)  : i32 {
      %152 = arith.index_cast %arg12 : i32 to index
      %c0_59 = arith.constant 0 : index
      %153 = vector.load %arg10[%152, %c0_59] : memref<65x48xf32, #tpu.memory_space<vmem>>, vector<1x48xf32>
      %154 = vector.extract_strided_slice %153 {offsets = [0, 0], sizes = [1, 16], strides = [1, 1]} : vector<1x48xf32> to vector<1x16xf32>
      %155 = vector.extract_strided_slice %arg15 {offsets = [0, 0], sizes = [1, 16], strides = [1, 1]} : vector<1x48xf32> to vector<1x16xf32>
      %156 = arith.addf %154, %155 : vector<1x16xf32>
      %157 = arith.negf %156 : vector<1x16xf32>
      %158 = math.exp %157 : vector<1x16xf32>
      %cst_60 = arith.constant 1.000000e+00 : f32
      %159 = vector.broadcast %cst_60 : f32 to vector<1x16xf32>
      %160 = arith.addf %159, %158 : vector<1x16xf32>
      %161 = arith.divf %159, %160 : vector<1x16xf32>
      %162 = vector.extract_strided_slice %153 {offsets = [0, 16], sizes = [1, 16], strides = [1, 1]} : vector<1x48xf32> to vector<1x16xf32>
      %163 = vector.extract_strided_slice %arg15 {offsets = [0, 16], sizes = [1, 16], strides = [1, 1]} : vector<1x48xf32> to vector<1x16xf32>
      %164 = arith.addf %162, %163 : vector<1x16xf32>
      %165 = arith.negf %164 : vector<1x16xf32>
      %166 = math.exp %165 : vector<1x16xf32>
      %cst_61 = arith.constant 1.000000e+00 : f32
      %167 = vector.broadcast %cst_61 : f32 to vector<1x16xf32>
      %168 = arith.addf %167, %166 : vector<1x16xf32>
      %169 = arith.divf %167, %168 : vector<1x16xf32>
      %170 = vector.extract_strided_slice %153 {offsets = [0, 32], sizes = [1, 16], strides = [1, 1]} : vector<1x48xf32> to vector<1x16xf32>
      %171 = vector.extract_strided_slice %arg15 {offsets = [0, 32], sizes = [1, 16], strides = [1, 1]} : vector<1x48xf32> to vector<1x16xf32>
      %172 = arith.mulf %161, %171 : vector<1x16xf32>
      %173 = arith.addf %170, %172 : vector<1x16xf32>
      %174 = math.tanh %173 : vector<1x16xf32>
      %cst_62 = arith.constant 1.000000e+00 : f32
      %175 = vector.broadcast %cst_62 : f32 to vector<1x16xf32>
      %176 = arith.subf %175, %169 : vector<1x16xf32>
      %177 = arith.mulf %176, %174 : vector<1x16xf32>
      %178 = arith.mulf %169, %arg13 : vector<1x16xf32>
      %179 = arith.addf %177, %178 : vector<1x16xf32>
      %cst_63 = arith.constant dense<0.000000e+00> : vector<1x96xf32>
      %180 = tpu.matmul %179, %107, %cst_63 {dimension_numbers = #tpu.dot_dimension_numbers<[1], [0], [0], [1], [0, 0, 1, 1], [], []>} : vector<1x16xf32>, vector<16x96xf32>, vector<1x96xf32> -> vector<1x96xf32>
      %181 = arith.addf %180, %111 : vector<1x96xf32>
      %182 = vector.extract_strided_slice %181 {offsets = [0, 0], sizes = [1, 48], strides = [1, 1]} : vector<1x96xf32> to vector<1x48xf32>
      %183 = vector.extract_strided_slice %181 {offsets = [0, 48], sizes = [1, 48], strides = [1, 1]} : vector<1x96xf32> to vector<1x48xf32>
      %cst_64 = arith.constant dense<0.000000e+00> : vector<1x48xf32>
      %184 = tpu.matmul %arg14, %110, %cst_64 {dimension_numbers = #tpu.dot_dimension_numbers<[1], [0], [0], [1], [0, 0, 1, 1], [], []>} : vector<1x16xf32>, vector<16x48xf32>, vector<1x48xf32> -> vector<1x48xf32>
      %185 = arith.addf %184, %112 : vector<1x48xf32>
      %186 = vector.extract_strided_slice %183 {offsets = [0, 0], sizes = [1, 16], strides = [1, 1]} : vector<1x48xf32> to vector<1x16xf32>
      %187 = vector.extract_strided_slice %185 {offsets = [0, 0], sizes = [1, 16], strides = [1, 1]} : vector<1x48xf32> to vector<1x16xf32>
      %188 = arith.addf %186, %187 : vector<1x16xf32>
      %189 = arith.negf %188 : vector<1x16xf32>
      %190 = math.exp %189 : vector<1x16xf32>
      %cst_65 = arith.constant 1.000000e+00 : f32
      %191 = vector.broadcast %cst_65 : f32 to vector<1x16xf32>
      %192 = arith.addf %191, %190 : vector<1x16xf32>
      %193 = arith.divf %191, %192 : vector<1x16xf32>
      %194 = vector.extract_strided_slice %183 {offsets = [0, 16], sizes = [1, 16], strides = [1, 1]} : vector<1x48xf32> to vector<1x16xf32>
      %195 = vector.extract_strided_slice %185 {offsets = [0, 16], sizes = [1, 16], strides = [1, 1]} : vector<1x48xf32> to vector<1x16xf32>
      %196 = arith.addf %194, %195 : vector<1x16xf32>
      %197 = arith.negf %196 : vector<1x16xf32>
      %198 = math.exp %197 : vector<1x16xf32>
      %cst_66 = arith.constant 1.000000e+00 : f32
      %199 = vector.broadcast %cst_66 : f32 to vector<1x16xf32>
      %200 = arith.addf %199, %198 : vector<1x16xf32>
      %201 = arith.divf %199, %200 : vector<1x16xf32>
      %202 = vector.extract_strided_slice %183 {offsets = [0, 32], sizes = [1, 16], strides = [1, 1]} : vector<1x48xf32> to vector<1x16xf32>
      %203 = vector.extract_strided_slice %185 {offsets = [0, 32], sizes = [1, 16], strides = [1, 1]} : vector<1x48xf32> to vector<1x16xf32>
      %204 = arith.mulf %193, %203 : vector<1x16xf32>
      %205 = arith.addf %202, %204 : vector<1x16xf32>
      %206 = math.tanh %205 : vector<1x16xf32>
      %cst_67 = arith.constant 1.000000e+00 : f32
      %207 = vector.broadcast %cst_67 : f32 to vector<1x16xf32>
      %208 = arith.subf %207, %201 : vector<1x16xf32>
      %209 = arith.mulf %208, %206 : vector<1x16xf32>
      %210 = arith.mulf %201, %arg14 : vector<1x16xf32>
      %211 = arith.addf %209, %210 : vector<1x16xf32>
      %212 = arith.index_cast %arg12 : i32 to index
      %c0_68 = arith.constant 0 : index
      %213 = vector.load %arg11[%212, %c0_68] : memref<65x16xf32, #tpu.memory_space<vmem>>, vector<1x16xf32>
      tpu.vector_store %arg11[%212, %c0_68], %211 {strides = array<i32>} : memref<65x16xf32, #tpu.memory_space<vmem>>, vector<1x16xf32>,
      scf.yield %179, %211, %182 : vector<1x16xf32>, vector<1x16xf32>, vector<1x48xf32>
    }
    %c65_i32_42 = arith.constant 65 : i32
    %c0_43 = arith.constant 0 : index
    %c0_44 = arith.constant 0 : index
    %117 = vector.load %arg11[%c0_43, %c0_44] : memref<65x16xf32, #tpu.memory_space<vmem>>, vector<65x16xf32>
    %118 = tpu.transpose %117, [1, 0] : vector<65x16xf32> -> vector<16x65xf32>
    %c5 = arith.constant 5 : index
    %c0_45 = arith.constant 0 : index
    %c0_46 = arith.constant 0 : index
    %119 = vector.load %arg6[%c5, %c0_45, %c0_46] : memref<6x16x128xf32, #tpu.memory_space<vmem>>, vector<1x16x128xf32>
    %120 = vector.shape_cast %119 : vector<1x16x128xf32> to vector<16x128xf32>
    %121 = vector.extract_strided_slice %120 {offsets = [0, 0], sizes = [9, 16], strides = [1, 1]} : vector<16x128xf32> to vector<9x16xf32>
    %122 = vector.extract_strided_slice %23 {offsets = [0, 6], sizes = [9, 1], strides = [1, 1]} : vector<18x8xf32> to vector<9x1xf32>
    %cst_47 = arith.constant dense<0.000000e+00> : vector<9x65xf32>
    %123 = tpu.matmul %121, %118, %cst_47 {dimension_numbers = #tpu.dot_dimension_numbers<[1], [0], [0], [1], [0, 0, 1, 1], [], []>} : vector<9x16xf32>, vector<16x65xf32>, vector<9x65xf32> -> vector<9x65xf32>
    %124 = vector.broadcast %122 : vector<9x1xf32> to vector<9x65xf32>
    %125 = arith.addf %123, %124 : vector<9x65xf32>
    %126 = arith.negf %125 : vector<9x65xf32>
    %127 = math.exp %126 : vector<9x65xf32>
    %cst_48 = arith.constant 1.000000e+00 : f32
    %128 = vector.broadcast %cst_48 : f32 to vector<9x65xf32>
    %129 = arith.addf %128, %127 : vector<9x65xf32>
    %130 = arith.divf %128, %129 : vector<9x65xf32>
    %cst_49 = arith.constant 9.99999996E-13 : f32
    %131 = vector.broadcast %cst_49 : f32 to vector<9x65xf32>
    %132 = arith.addf %13, %131 : vector<9x65xf32>
    %133 = math.rsqrt %132 : vector<9x65xf32>
    %134 = arith.mulf %130, %16 : vector<9x65xf32>
    %135 = arith.mulf %134, %133 : vector<9x65xf32>
    %136 = arith.mulf %135, %7 : vector<9x65xf32>
    %137 = arith.mulf %135, %8 : vector<9x65xf32>
    %138 = tpu.concatenate %136, %137 in 0 : vector<9x65xf32>, vector<9x65xf32> -> vector<18x65xf32>
    %c0_50 = arith.constant 0 : index
    %c0_51 = arith.constant 0 : index
    %139 = vector.load %arg4[%c0_50, %c0_51] : memref<16x18xf32, #tpu.memory_space<vmem>>, vector<16x18xf32>
    %cst_52 = arith.constant dense<0.000000e+00> : vector<16x65xf32>
    %140 = tpu.matmul %139, %138, %cst_52 {dimension_numbers = #tpu.dot_dimension_numbers<[1], [0], [0], [1], [0, 0, 1, 1], [], []>} : vector<16x18xf32>, vector<18x65xf32>, vector<16x65xf32> -> vector<16x65xf32>
    %141 = vector.extract_strided_slice %140 {offsets = [0, 0], sizes = [8, 65], strides = [1, 1]} : vector<16x65xf32> to vector<8x65xf32>
    %142 = vector.extract_strided_slice %140 {offsets = [8, 0], sizes = [8, 65], strides = [1, 1]} : vector<16x65xf32> to vector<8x65xf32>
    %cst_53 = arith.constant 0.000000e+00 : f32
    %143 = vector.broadcast %cst_53 : f32 to vector<8x1xf32>
    %144 = tpu.concatenate %143, %142 in 1 : vector<8x1xf32>, vector<8x65xf32> -> vector<8x66xf32>
    %145 = tpu.concatenate %141, %143 in 1 : vector<8x65xf32>, vector<8x1xf32> -> vector<8x66xf32>
    %146 = arith.addf %144, %145 : vector<8x66xf32>
    %c0_54 = arith.constant 0 : index
    %c0_55 = arith.constant 0 : index
    %147 = vector.load %arg5[%c0_54, %c0_55] : memref<8x66xf32, #tpu.memory_space<vmem>>, vector<8x66xf32>
    %148 = arith.mulf %146, %147 : vector<8x66xf32>
    %c0_56 = arith.constant 0 : index
    %c0_57 = arith.constant 0 : index
    %c0_58 = arith.constant 0 : index
    %149 = vector.load %arg9[%c0_56, %c0_57, %c0_58] : memref<1x8x66xf32, #tpu.memory_space<vmem>>, vector<1x8x66xf32>
    %150 = vector.shape_cast %149 : vector<1x8x66xf32> to vector<8x66xf32>
    %151 = vector.shape_cast %148 : vector<8x66xf32> to vector<1x8x66xf32>
    tpu.vector_store %arg9[%c0_56, %c0_57, %c0_58], %151 {strides = array<i32>} : memref<1x8x66xf32, #tpu.memory_space<vmem>>, vector<1x8x66xf32>,
    return
  }
  func.func @transform_0(%arg0: i32) -> (i32, i32, i32) {
    %c0_i32 = arith.constant 0 : i32
    %c0_i32_0 = arith.constant 0 : i32
    %c0_i32_1 = arith.constant 0 : i32
    return %arg0, %c0_i32, %c0_i32_0 : i32, i32, i32
  }
  func.func @transform_1(%arg0: i32) -> (i32, i32, i32) {
    %c0_i32 = arith.constant 0 : i32
    %c0_i32_0 = arith.constant 0 : i32
    %c0_i32_1 = arith.constant 0 : i32
    return %arg0, %c0_i32, %c0_i32_0 : i32, i32, i32
  }
  func.func @transform_2(%arg0: i32) -> (i32, i32) {
    %c0_i32 = arith.constant 0 : i32
    %c0_i32_0 = arith.constant 0 : i32
    %c0_i32_1 = arith.constant 0 : i32
    return %c0_i32, %c0_i32_0 : i32, i32
  }
  func.func @transform_3(%arg0: i32) -> (i32, i32) {
    %c0_i32 = arith.constant 0 : i32
    %c0_i32_0 = arith.constant 0 : i32
    %c0_i32_1 = arith.constant 0 : i32
    return %c0_i32, %c0_i32_0 : i32, i32
  }
  func.func @transform_4(%arg0: i32) -> (i32, i32) {
    %c0_i32 = arith.constant 0 : i32
    %c0_i32_0 = arith.constant 0 : i32
    %c0_i32_1 = arith.constant 0 : i32
    return %c0_i32, %c0_i32_0 : i32, i32
  }
  func.func @transform_5(%arg0: i32) -> (i32, i32, i32) {
    %c0_i32 = arith.constant 0 : i32
    %c0_i32_0 = arith.constant 0 : i32
    %c0_i32_1 = arith.constant 0 : i32
    %c0_i32_2 = arith.constant 0 : i32
    return %c0_i32, %c0_i32_0, %c0_i32_1 : i32, i32, i32
  }
  func.func @transform_6(%arg0: i32) -> (i32, i32) {
    %c0_i32 = arith.constant 0 : i32
    %c0_i32_0 = arith.constant 0 : i32
    %c0_i32_1 = arith.constant 0 : i32
    return %c0_i32, %c0_i32_0 : i32, i32
  }
  func.func @transform_7(%arg0: i32) -> (i32, i32) {
    %c0_i32 = arith.constant 0 : i32
    %c0_i32_0 = arith.constant 0 : i32
    %c0_i32_1 = arith.constant 0 : i32
    return %c0_i32, %c0_i32_0 : i32, i32
  }
  func.func @transform_8(%arg0: i32) -> (i32, i32, i32) {
    %c0_i32 = arith.constant 0 : i32
    %c0_i32_0 = arith.constant 0 : i32
    %c0_i32_1 = arith.constant 0 : i32
    return %arg0, %c0_i32, %c0_i32_0 : i32, i32, i32
  }
}

</mosaic_0001>

<llo_original>
// kernel: tpu_custom_call.1
$region0: #{tpu_custom_call.1}
  #allocation0 [shape = 'u32[]', space=smem, size = 0x4, offset = 0x4, fixed_abs, tag = 'smem constant byte address 0x4 - core index']
  #allocation1 [shape = 'u32[144,128]{1,0:T(1,128)}', space=vmem, size = 0x12000, scoped, tag = 'internal scratch']
  #allocation2 [shape = 'f32[65,48]{1,0:T(8,128)}', space=vmem, size = 0x9000, scoped, tag = 'scratch operand']
  #allocation3 [shape = 'f32[65,16]{1,0:T(8,128)}', space=vmem, size = 0x9000, scoped, tag = 'scratch operand']
  %s0 = inlined_call_operand.vmem [shape: f32[2,16,65], index: 0, kind: input, shape index: {}]
  %s1 = inlined_call_operand.vmem [shape: f32[2,16,65], index: 1, kind: input, shape index: {}]
  %s2 = inlined_call_operand.vmem [shape: f32[18,16], index: 2, kind: input, shape index: {}]
  %s3 = inlined_call_operand.hbm [shape: f32[16,18], index: 3, kind: input, shape index: {}]
  %s4 = inlined_call_operand.hbm [shape: f32[8,66], index: 4, kind: input, shape index: {}]
  %s5 = inlined_call_operand.hbm [shape: f32[6,16,128], index: 5, kind: input, shape index: {}]
  %s6 = inlined_call_operand.vmem [shape: f32[18,8], index: 6, kind: input, shape index: {}]
  %s7 = inlined_call_operand.vmem [shape: f32[3,128], index: 7, kind: input, shape index: {}]
  %s8 = inlined_call_operand.hbm [shape: f32[2,8,66], index: 8, kind: output, shape index: {}]
  %s9 = sld [smem:[#allocation0]]
  $region84: #{tpu_custom_call.1} parent=0
    _
  %s11 = ssub.s32 1, %s9
  %s12 = scalar_select 0, %s11, %s9
  $region1: #{tpu_custom_call.1} parent=0
    #allocation4 [shape = 'u8[8192]{0}', space=vmem, size = 0x2000, scoped, tag = 'input window, operand 3, single buffered']
    #allocation5 [shape = 's32[2]{0}', space=sflag, size = 0x8, scoped, tag = 'scoped memory for tpu_custom_call.1']
    #allocation6 [shape = 's32[2]{0}', space=sflag, size = 0x8, scoped, tag = 'scoped memory for tpu_custom_call.1']
    #allocation7 [shape = 'u8[4096]{0}', space=vmem, size = 0x1000, scoped, tag = 'input window, operand 4, single buffered']
    #allocation8 [shape = 's32[1]{0}', space=sflag, size = 0x4, scoped, tag = 'scoped memory for tpu_custom_call.1']
    #allocation9 [shape = 'u8[49152]{0}', space=vmem, size = 0xc000, scoped, tag = 'input window, operand 5, single buffered']
    #allocation10 [shape = 'u8[8192]{0}', space=vmem, size = 0x2000, scoped, tag = 'output window, operand 0']
    %13 = vsyncpa [#allocation5], 0
    %14 = vsyncpa [#allocation8], 0
    %15 = vsyncpa [#allocation6], 0
    %s16 = scalar_lea.sflag [#allocation6], 1
    %17 = vsyncpa %s16, 0
    loop: start=0, step=1, limit=4
    $region2: #{tpu_custom_call.1} parent=1 // loop_pre_header
      _
    $region3: #{tpu_custom_call.1} parent=1 // loop_header
      %s19 = sphi 0, %s23
      %p20 = scmp.ge.s32.totalorder %s19, 4
      %s29 = sphi 0, %s31
      %s32 = sphi 0, %s29
      %s33 = sphi 0, %s32
      %s49 = sphi 0, %s33
      %s55 = sphi 0, %s57
      %s58 = sphi 0, %s55
      %s59 = sphi 0, %s58
      %s75 = sphi 0, %s59
      %s79 = sphi 0, %s79
      %s81 = sphi 0, %s79
      %s82 = sphi 0, %s81
      %s96 = sphi 0, %s82
      %s100 = sphi 0, %s100
      %s102 = sphi 0, %s100
      %s103 = sphi 0, %s102
      %s117 = sphi 0, %s103
      %s121 = sphi 0, %s121
      %s123 = sphi 0, %s121
      %s124 = sphi 0, %s123
      %s138 = sphi 0, %s124
      %s142 = sphi 0, %s142
      %s144 = sphi 0, %s142
      %s145 = sphi 0, %s144
      %s159 = sphi 0, %s145
      %s163 = sphi 0, %s163
      %s165 = sphi 0, %s163
      %s166 = sphi 0, %s165
      %s180 = sphi 0, %s166
      %s184 = sphi 0, %s184
      %s186 = sphi 0, %s184
      %s187 = sphi 0, %s186
      %s201 = sphi 0, %s187
      %s207 = sphi 0, %s209
      %s210 = sphi 0, %s207
      %s211 = sphi 0, %s210
      %s227 = sphi 0, %s211
    $region4: #{tpu_custom_call.1} parent=1 // loop_header_branch
      %22 = sbr.rel (%p20) target = $region8
    $region5: #{tpu_custom_call.1} parent=1 // loop_body
      %s24 = ssub.s32 %s19, 1
      %s25 = ssub.s32 %s19, 2
      %s26 = sadd.s32 %s19, 1
      %s27 = ssub.s32 %s19, %s26
      %p28 = scmp.eq.s32.totalorder %s27, 0
      %s30 = sadd.s32 %s29, 1
      %s31 = scalar_select %p28, %s29, %s30
      %p34 = pneg %p28
      %p35 = scmp.eq.s32.totalorder %s19, 1
      %p36 = por %p34, %p35
      %p37 = scmp.ne.s32.totalorder %s29, %s32
      %p38 = scmp.eq.s32.totalorder %s19, 0
      %p39 = por %p37, %p38
      %p40 = scmp.ne.s32.totalorder %s29, %s32
      %p41 = scmp.eq.s32.totalorder %s24, 1
      %p42 = por %p40, %p41
      %p43 = scmp.ne.s32.totalorder %s32, %s33
      %p44 = scmp.eq.s32.totalorder %s24, 0
      %p45 = por %p43, %p44
      %p46 = scmp.ne.s32.totalorder %s32, %s33
      %p47 = scmp.eq.s32.totalorder %s25, 1
      %p48 = por %p46, %p47
      %p50 = scmp.ne.s32.totalorder %s33, %s49
      %p51 = scmp.eq.s32.totalorder %s25, 0
      %p52 = por %p50, %p51
      %s53 = ssub.s32 %s19, %s26
      %p54 = scmp.eq.s32.totalorder %s53, 0
      %s56 = sadd.s32 %s55, 1
      %s57 = scalar_select %p54, %s55, %s56
      %p60 = pneg %p54
      %p61 = scmp.eq.s32.totalorder %s19, 1
      %p62 = por %p60, %p61
      %p63 = scmp.ne.s32.totalorder %s55, %s58
      %p64 = scmp.eq.s32.totalorder %s19, 0
      %p65 = por %p63, %p64
      %p66 = scmp.ne.s32.totalorder %s55, %s58
      %p67 = scmp.eq.s32.totalorder %s24, 1
      %p68 = por %p66, %p67
      %p69 = scmp.ne.s32.totalorder %s58, %s59
      %p70 = scmp.eq.s32.totalorder %s24, 0
      %p71 = por %p69, %p70
      %p72 = scmp.ne.s32.totalorder %s58, %s59
      %p73 = scmp.eq.s32.totalorder %s25, 1
      %p74 = por %p72, %p73
      %p76 = scmp.ne.s32.totalorder %s59, %s75
      %p77 = scmp.eq.s32.totalorder %s25, 0
      %p78 = por %p76, %p77
      %s80 = sadd.s32 %s79, 1
      %p83 = scmp.eq.s32.totalorder %s19, 1
      %p84 = scmp.ne.s32.totalorder %s79, %s81
      %p85 = scmp.eq.s32.totalorder %s19, 0
      %p86 = por %p84, %p85
      %p87 = scmp.ne.s32.totalorder %s79, %s81
      %p88 = scmp.eq.s32.totalorder %s24, 1
      %p89 = por %p87, %p88
      %p90 = scmp.ne.s32.totalorder %s81, %s82
      %p91 = scmp.eq.s32.totalorder %s24, 0
      %p92 = por %p90, %p91
      %p93 = scmp.ne.s32.totalorder %s81, %s82
      %p94 = scmp.eq.s32.totalorder %s25, 1
      %p95 = por %p93, %p94
      %p97 = scmp.ne.s32.totalorder %s82, %s96
      %p98 = scmp.eq.s32.totalorder %s25, 0
      %p99 = por %p97, %p98
      %s101 = sadd.s32 %s100, 1
      %p104 = scmp.eq.s32.totalorder %s19, 1
      %p105 = scmp.ne.s32.totalorder %s100, %s102
      %p106 = scmp.eq.s32.totalorder %s19, 0
      %p107 = por %p105, %p106
      %p108 = scmp.ne.s32.totalorder %s100, %s102
      %p109 = scmp.eq.s32.totalorder %s24, 1
      %p110 = por %p108, %p109
      %p111 = scmp.ne.s32.totalorder %s102, %s103
      %p112 = scmp.eq.s32.totalorder %s24, 0
      %p113 = por %p111, %p112
      %p114 = scmp.ne.s32.totalorder %s102, %s103
      %p115 = scmp.eq.s32.totalorder %s25, 1
      %p116 = por %p114, %p115
      %p118 = scmp.ne.s32.totalorder %s103, %s117
      %p119 = scmp.eq.s32.totalorder %s25, 0
      %p120 = por %p118, %p119
      %s122 = sadd.s32 %s121, 1
      %p125 = scmp.eq.s32.totalorder %s19, 1
      %p126 = scmp.ne.s32.totalorder %s121, %s123
      %p127 = scmp.eq.s32.totalorder %s19, 0
      %p128 = por %p126, %p127
      %p129 = scmp.ne.s32.totalorder %s121, %s123
      %p130 = scmp.eq.s32.totalorder %s24, 1
      %p131 = por %p129, %p130
      %p132 = scmp.ne.s32.totalorder %s123, %s124
      %p133 = scmp.eq.s32.totalorder %s24, 0
      %p134 = por %p132, %p133
      %p135 = scmp.ne.s32.totalorder %s123, %s124
      %p136 = scmp.eq.s32.totalorder %s25, 1
      %p137 = por %p135, %p136
      %p139 = scmp.ne.s32.totalorder %s124, %s138
      %p140 = scmp.eq.s32.totalorder %s25, 0
      %p141 = por %p139, %p140
      %s143 = sadd.s32 %s142, 1
      %p146 = scmp.eq.s32.totalorder %s19, 1
      %p147 = scmp.ne.s32.totalorder %s142, %s144
      %p148 = scmp.eq.s32.totalorder %s19, 0
      %p149 = por %p147, %p148
      %p150 = scmp.ne.s32.totalorder %s142, %s144
      %p151 = scmp.eq.s32.totalorder %s24, 1
      %p152 = por %p150, %p151
      %p153 = scmp.ne.s32.totalorder %s144, %s145
      %p154 = scmp.eq.s32.totalorder %s24, 0
      %p155 = por %p153, %p154
      %p156 = scmp.ne.s32.totalorder %s144, %s145
      %p157 = scmp.eq.s32.totalorder %s25, 1
      %p158 = por %p156, %p157
      %p160 = scmp.ne.s32.totalorder %s145, %s159
      %p161 = scmp.eq.s32.totalorder %s25, 0
      %p162 = por %p160, %p161
      %s164 = sadd.s32 %s163, 1
      %p167 = scmp.eq.s32.totalorder %s19, 1
      %p168 = scmp.ne.s32.totalorder %s163, %s165
      %p169 = scmp.eq.s32.totalorder %s19, 0
      %p170 = por %p168, %p169
      %p171 = scmp.ne.s32.totalorder %s163, %s165
      %p172 = scmp.eq.s32.totalorder %s24, 1
      %p173 = por %p171, %p172
      %p174 = scmp.ne.s32.totalorder %s165, %s166
      %p175 = scmp.eq.s32.totalorder %s24, 0
      %p176 = por %p174, %p175
      %p177 = scmp.ne.s32.totalorder %s165, %s166
      %p178 = scmp.eq.s32.totalorder %s25, 1
      %p179 = por %p177, %p178
      %p181 = scmp.ne.s32.totalorder %s166, %s180
      %p182 = scmp.eq.s32.totalorder %s25, 0
      %p183 = por %p181, %p182
      %s185 = sadd.s32 %s184, 1
      %p188 = scmp.eq.s32.totalorder %s19, 1
      %p189 = scmp.ne.s32.totalorder %s184, %s186
      %p190 = scmp.eq.s32.totalorder %s19, 0
      %p191 = por %p189, %p190
      %p192 = scmp.ne.s32.totalorder %s184, %s186
      %p193 = scmp.eq.s32.totalorder %s24, 1
      %p194 = por %p192, %p193
      %p195 = scmp.ne.s32.totalorder %s186, %s187
      %p196 = scmp.eq.s32.totalorder %s24, 0
      %p197 = por %p195, %p196
      %p198 = scmp.ne.s32.totalorder %s186, %s187
      %p199 = scmp.eq.s32.totalorder %s25, 1
      %p200 = por %p198, %p199
      %p202 = scmp.ne.s32.totalorder %s187, %s201
      %p203 = scmp.eq.s32.totalorder %s25, 0
      %p204 = por %p202, %p203
      %s205 = ssub.s32 %s19, %s26
      %p206 = scmp.eq.s32.totalorder %s205, 0
      %s208 = sadd.s32 %s207, 1
      %s209 = scalar_select %p206, %s207, %s208
      %p212 = pneg %p206
      %p213 = scmp.eq.s32.totalorder %s19, 1
      %p214 = por %p212, %p213
      %p215 = scmp.ne.s32.totalorder %s207, %s210
      %p216 = scmp.eq.s32.totalorder %s19, 0
      %p217 = por %p215, %p216
      %p218 = scmp.ne.s32.totalorder %s207, %s210
      %p219 = scmp.eq.s32.totalorder %s24, 1
      %p220 = por %p218, %p219
      %p221 = scmp.ne.s32.totalorder %s210, %s211
      %p222 = scmp.eq.s32.totalorder %s24, 0
      %p223 = por %p221, %p222
      %p224 = scmp.ne.s32.totalorder %s210, %s211
      %p225 = scmp.eq.s32.totalorder %s25, 1
      %p226 = por %p224, %p225
      %p228 = scmp.ne.s32.totalorder %s211, %s227
      %p229 = scmp.eq.s32.totalorder %s25, 0
      %p230 = por %p228, %p229
      %p231 = scmp.le.s32.totalorder 1, %s19
      %p232 = scmp.lt.s32.totalorder %s19, 3
      %p233 = pnand %p231, %p232
      %p234 = pneg %p233
      // Predicated region
      $region9: #{tpu_custom_call.1} parent=5 // pred_check
        _
      $region10: #{tpu_custom_call.1} parent=5 // pred_check_branch
        %236 = sbr.rel (%p233) target = $region12
      $region11: #{tpu_custom_call.1} parent=5 // pred_region
        %s237 = ssub.s32 %s19, 1
        // Predicated region
        $region13: #{tpu_custom_call.1} parent=11 // pred_check
          %p238 = pneg %p92
        $region14: #{tpu_custom_call.1} parent=11 // pred_check_branch
          %240 = sbr.rel (%p238) target = $region16
        $region15: #{tpu_custom_call.1} parent=11 // pred_region
          _
        $region16: #{tpu_custom_call.1} parent=11 // pred_fallthru
          _
        // Predicated region
        $region17: #{tpu_custom_call.1} parent=11 // pred_check
          %p241 = pneg %p113
        $region18: #{tpu_custom_call.1} parent=11 // pred_check_branch
          %243 = sbr.rel (%p241) target = $region20
        $region19: #{tpu_custom_call.1} parent=11 // pred_region
          %s245 = ssub.s32 256, 256
          %246 = vsyncadd [#allocation5], %s245
          %s247 = sshll.u32 [#allocation4], 4
          %s248 = int_to_ptr.vmem [resolvable:$true] %s247
          %253 = dma.hbm_to_vmem [thread:$0]  %s3, 256, %s248, [#allocation5], 128, 128, 8
        $region20: #{tpu_custom_call.1} parent=11 // pred_fallthru
          _
        // Predicated region
        $region21: #{tpu_custom_call.1} parent=11 // pred_check
          %p254 = pneg %p134
        $region22: #{tpu_custom_call.1} parent=11 // pred_check_branch
          %256 = sbr.rel (%p254) target = $region24
        $region23: #{tpu_custom_call.1} parent=11 // pred_region
          %s258 = ssub.s32 128, 128
          %259 = vsyncadd [#allocation8], %s258
          %s261 = sshll.u32 [#allocation7], 4
          %s262 = int_to_ptr.vmem [resolvable:$true] %s261
          %264 = dma.hbm_to_vmem [thread:$0]  %s4, 128, %s262, [#allocation8]
        $region24: #{tpu_custom_call.1} parent=11 // pred_fallthru
          _
        // Predicated region
        $region25: #{tpu_custom_call.1} parent=11 // pred_check
          %p265 = pneg %p155
        $region26: #{tpu_custom_call.1} parent=11 // pred_check_branch
          %267 = sbr.rel (%p265) target = $region28
        $region27: #{tpu_custom_call.1} parent=11 // pred_region
          %s269 = ssub.s32 1536, 1536
          %270 = vsyncadd [#allocation8], %s269
          %s271 = sshll.u32 [#allocation9], 4
          %s272 = int_to_ptr.vmem [resolvable:$true] %s271
          %277 = dma.hbm_to_vmem [thread:$0]  %s5, 1536, %s272, [#allocation8], 128, 128, 8
        $region28: #{tpu_custom_call.1} parent=11 // pred_fallthru
          _
        // Predicated region
        $region29: #{tpu_custom_call.1} parent=11 // pred_check
          %p278 = pneg %p176
        $region30: #{tpu_custom_call.1} parent=11 // pred_check_branch
          %280 = sbr.rel (%p278) target = $region32
        $region31: #{tpu_custom_call.1} parent=11 // pred_region
          _
        $region32: #{tpu_custom_call.1} parent=11 // pred_fallthru
          _
        // Predicated region
        $region33: #{tpu_custom_call.1} parent=11 // pred_check
          %p281 = pneg %p197
        $region34: #{tpu_custom_call.1} parent=11 // pred_check_branch
          %283 = sbr.rel (%p281) target = $region36
        $region35: #{tpu_custom_call.1} parent=11 // pred_region
          _
        $region36: #{tpu_custom_call.1} parent=11 // pred_fallthru
          _
      $region12: #{tpu_custom_call.1} parent=5 // pred_fallthru
        _
      %p284 = scmp.lt.s32.totalorder %s19, 2
      // Predicated region
      $region37: #{tpu_custom_call.1} parent=5 // pred_check
        %p285 = pneg %p284
      $region38: #{tpu_custom_call.1} parent=5 // pred_check_branch
        %287 = sbr.rel (%p285) target = $region40
      $region39: #{tpu_custom_call.1} parent=5 // pred_region
        // Predicated region
        $region41: #{tpu_custom_call.1} parent=39 // pred_check
          %p288 = pneg %p39
        $region42: #{tpu_custom_call.1} parent=39 // pred_check_branch
          %290 = sbr.rel (%p288) target = $region44
        $region43: #{tpu_custom_call.1} parent=39 // pred_region
          %p291 = scmp.lt.s32.totalorder %s19, 1
          %s292 = scalar_select %p291, %s19, 1
          %s293 = smul.addr %s292, 2
          %s294 = smul.addr %s293, 8
          %s295 = scalar_lea.vmem %s0, %s294
        $region44: #{tpu_custom_call.1} parent=39 // pred_fallthru
          _
        // Predicated region
        $region45: #{tpu_custom_call.1} parent=39 // pred_check
          %p296 = pneg %p65
        $region46: #{tpu_custom_call.1} parent=39 // pred_check_branch
          %298 = sbr.rel (%p296) target = $region48
        $region47: #{tpu_custom_call.1} parent=39 // pred_region
          %p299 = scmp.lt.s32.totalorder %s19, 1
          %s300 = scalar_select %p299, %s19, 1
          %s301 = smul.addr %s300, 2
          %s302 = smul.addr %s301, 8
          %s303 = scalar_lea.vmem %s1, %s302
        $region48: #{tpu_custom_call.1} parent=39 // pred_fallthru
          _
      $region40: #{tpu_custom_call.1} parent=5 // pred_fallthru
        _
      %p304 = scmp.le.s32.totalorder 1, %s19
      %p305 = scmp.lt.s32.totalorder %s19, 3
      %p306 = pnand %p304, %p305
      %p307 = pneg %p306
      // Predicated region
      $region49: #{tpu_custom_call.1} parent=5 // pred_check
        _
      $region50: #{tpu_custom_call.1} parent=5 // pred_check_branch
        %309 = sbr.rel (%p306) target = $region52
      $region51: #{tpu_custom_call.1} parent=5 // pred_region
        %s310 = ssub.s32 %s19, 1
        // Predicated region
        $region53: #{tpu_custom_call.1} parent=51 // pred_check
          %p311 = pneg %p113
        $region54: #{tpu_custom_call.1} parent=51 // pred_check_branch
          %313 = sbr.rel (%p311) target = $region56
        $region55: #{tpu_custom_call.1} parent=51 // pred_region
          %314 = dma.done [#allocation5], 256
        $region56: #{tpu_custom_call.1} parent=51 // pred_fallthru
          _
        // Predicated region
        $region57: #{tpu_custom_call.1} parent=51 // pred_check
          %p315 = pneg %p134
        $region58: #{tpu_custom_call.1} parent=51 // pred_check_branch
          %317 = sbr.rel (%p315) target = $region60
        $region59: #{tpu_custom_call.1} parent=51 // pred_region
          %318 = dma.done [#allocation8], 128
        $region60: #{tpu_custom_call.1} parent=51 // pred_fallthru
          _
        // Predicated region
        $region61: #{tpu_custom_call.1} parent=51 // pred_check
          %p319 = pneg %p155
        $region62: #{tpu_custom_call.1} parent=51 // pred_check_branch
          %321 = sbr.rel (%p319) target = $region64
        $region63: #{tpu_custom_call.1} parent=51 // pred_region
          %322 = dma.done [#allocation8], 1536
        $region64: #{tpu_custom_call.1} parent=51 // pred_fallthru
          _
        %p323 = scmp.lt.s32.totalorder %s24, 1
        %s324 = scalar_select %p323, %s24, 1
        %s325 = smul.addr %s324, 2
        %s326 = smul.addr %s325, 8
        %s327 = scalar_lea.vmem %s0, %s326
        %p328 = pneg %p45
        %p329 = pneg %p42
        %p330 = scmp.lt.s32.totalorder %s24, 1
        %s331 = scalar_select %p330, %s24, 1
        %s332 = smul.addr %s331, 2
        %s333 = smul.addr %s332, 8
        %s334 = scalar_lea.vmem %s1, %s333
        %p335 = pneg %p71
        %p336 = pneg %p68
        %p337 = pneg %p92
        %p338 = pneg %p89
        %p339 = pneg %p113
        %p340 = pneg %p110
        %p341 = pneg %p134
        %p342 = pneg %p131
        %p343 = pneg %p155
        %p344 = pneg %p152
        %p345 = pneg %p176
        %p346 = pneg %p173
        %p347 = pneg %p197
        %p348 = pneg %p194
        %p349 = pneg %p223
        %p350 = pneg %p220
        %s351 = sand.u32 %s210, 1
        %s352 = scalar_lea.sflag [#allocation6], %s351
        %s353 = sand.u32 %s210, 1
        %s354 = smul.addr %s353, 8
        %s355 = scalar_lea.vmem [#allocation10], %s354
        %p356 = scmp.lt.s32.totalorder %s24, 1
        %s357 = scalar_select %p356, %s24, 1
        %s358 = smul.addr %s357, 2
        %s359 = smul.addr %s358, 8
        %s360 = scalar_lea.vmem %s0, %s359
        %p361 = scmp.lt.s32.totalorder %s24, 1
        %s362 = scalar_select %p361, %s24, 1
        %s363 = smul.addr %s362, 2
        %s364 = smul.addr %s363, 8
        %s365 = scalar_lea.vmem %s1, %s364
        %v366 = vld [vmem:[%s360] sm:$0xff]
        %v367 = vld [vmem:[%s360 + $0x8] sm:$0xff]
        %v368 = vld [vmem:[%s365] sm:$0xff]
        %v369 = vld [vmem:[%s365 + $0x8] sm:$0xff]
        %v370 = vld [vmem:[%s2] sm:$0xff]
        %v371 = vld [vmem:[%s2 + $0x8] sm:$0xff]
        %v372 = vld [vmem:[%s2 + $0x10] sm:$0x3]
        %vm373 = vcmask 130048
        %v375 = vsel %vm373, %v370, 0
        %v378 = vsel %vm373, %v371, 0
        %v381 = vsel %vm373, %v372, 0
        %383 = vmatprep.subr.mxu0 0.0
        %384 = vmatpush1.msra.mxu0 0.0
        %385 = vmatprep.subr.mxu0 0.0
        %386 = vmatpush1.msra.mxu0 0.0
        %387 = vmatprep.subr.mxu0 0.0
        %388 = vmatpush1.msra.mxu0 0.0
        %389 = vmatprep.subr.mxu0 0.0
        %390 = vmatpush1.msra.mxu0 0.0
        %391 = vmatprep.subr.mxu0 0.0
        %392 = vmatpush1.msra.mxu0 0.0
        %393 = vmatprep.subr.mxu0 0.0
        %394 = vmatpush1.msra.mxu0 0.0
        %395 = vmatprep.subr.mxu0 0.0
        %396 = vmatpush1.msra.mxu0 0.0
        %397 = vmatprep.subr.mxu0 0.0
        %398 = vmatpush1.msra.mxu0 0.0
        %399 = vmatprep.subr.mxu0 0.0
        %400 = vmatpush1.msra.mxu0 0.0
        %401 = vmatprep.subr.mxu0 0.0
        %402 = vmatpush1.msra.mxu0 0.0
        %403 = vmatprep.subr.mxu0 0.0
        %404 = vmatpush1.msra.mxu0 0.0
        %405 = vmatprep.subr.mxu0 0.0
        %406 = vmatpush1.msra.mxu0 0.0
        %407 = vmatprep.subr.mxu0 0.0
        %408 = vmatpush1.msra.mxu0 0.0
        %409 = vmatprep.subr.mxu0 0.0
        %410 = vmatpush1.msra.mxu0 0.0
        %411 = vmatprep.subr.mxu0 0.0
        %412 = vmatpush1.msra.mxu0 %v367
        %413 = vmatprep.subr.mxu0 0.0
        %414 = vmatpush1.msra.mxu0 %v366
        %415 = vmatprep.subr.mxu0 0.0
        %416 = vmatpush2.msra.mxu0 0.0
        %417 = vmatprep.subr.mxu0 0.0
        %418 = vmatpush2.msra.mxu0 0.0
        %419 = vmatprep.subr.mxu0 0.0
        %420 = vmatpush2.msra.mxu0 0.0
        %421 = vmatprep.subr.mxu0 0.0
        %422 = vmatpush2.msra.mxu0 0.0
        %423 = vmatprep.subr.mxu0 0.0
        %424 = vmatpush2.msra.mxu0 0.0
        %425 = vmatprep.subr.mxu0 0.0
        %426 = vmatpush2.msra.mxu0 0.0
        %427 = vmatprep.subr.mxu0 0.0
        %428 = vmatpush2.msra.mxu0 0.0
        %429 = vmatprep.subr.mxu0 0.0
        %430 = vmatpush2.msra.mxu0 0.0
        %431 = vmatprep.subr.mxu0 0.0
        %432 = vmatpush2.msra.mxu0 0.0
        %433 = vmatprep.subr.mxu0 0.0
        %434 = vmatpush2.msra.mxu0 0.0
        %435 = vmatprep.subr.mxu0 0.0
        %436 = vmatpush2.msra.mxu0 0.0
        %437 = vmatprep.subr.mxu0 0.0
        %438 = vmatpush2.msra.mxu0 0.0
        %439 = vmatprep.subr.mxu0 0.0
        %440 = vmatpush2.msra.mxu0 0.0
        %441 = vmatprep.subr.mxu0 0.0
        %442 = vmatpush2.msra.mxu0 0.0
        %443 = vmatprep.subr.mxu0 0.0
        %444 = vmatpush2.msra.mxu0 0.0
        %445 = vmatprep.subr.mxu0 0.0
        %446 = vmatpush2.msra.mxu0 0.0
        %447 = vmatprep.mubr.f32.mxu0 0.0
        %448 = vmatmul.mubr.f32.gmra.mxu0 %v375
        %v449 = vpop.f32.mrf.mxu0
        %v450 = vadd.f32 0.0, %v449
        %v451 = vpop.f32.mrf.mxu0
        %452 = vmatprep.mubr.f32.mxu0 0.0
        %453 = vmatmul.mubr.f32.gmra.mxu0 %v378
        %v454 = vpop.f32.mrf.mxu0
        %v455 = vadd.f32 0.0, %v454
        %v456 = vpop.f32.mrf.mxu0
        %457 = vmatprep.mubr.f32.mxu0 0.0
        %458 = vmatmul.mubr.f32.gmra.mxu0 %v381
        %v459 = vpop.f32.mrf.mxu0
        %v460 = vadd.f32 0.0, %v459
        %v461 = vpop.f32.mrf.mxu0
        %462 = vdwg.mxu0
        %463 = vmatprep.subr.mxu0 0.0
        %464 = vmatpush1.msra.mxu0 0.0
        %465 = vmatprep.subr.mxu0 0.0
        %466 = vmatpush1.msra.mxu0 0.0
        %467 = vmatprep.subr.mxu0 0.0
        %468 = vmatpush1.msra.mxu0 0.0
        %469 = vmatprep.subr.mxu0 0.0
        %470 = vmatpush1.msra.mxu0 0.0
        %471 = vmatprep.subr.mxu0 0.0
        %472 = vmatpush1.msra.mxu0 0.0
        %473 = vmatprep.subr.mxu0 0.0
        %474 = vmatpush1.msra.mxu0 0.0
        %475 = vmatprep.subr.mxu0 0.0
        %476 = vmatpush1.msra.mxu0 0.0
        %477 = vmatprep.subr.mxu0 0.0
        %478 = vmatpush1.msra.mxu0 0.0
        %479 = vmatprep.subr.mxu0 0.0
        %480 = vmatpush1.msra.mxu0 0.0
        %481 = vmatprep.subr.mxu0 0.0
        %482 = vmatpush1.msra.mxu0 0.0
        %483 = vmatprep.subr.mxu0 0.0
        %484 = vmatpush1.msra.mxu0 0.0
        %485 = vmatprep.subr.mxu0 0.0
        %486 = vmatpush1.msra.mxu0 0.0
        %487 = vmatprep.subr.mxu0 0.0
        %488 = vmatpush1.msra.mxu0 0.0
        %489 = vmatprep.subr.mxu0 0.0
        %490 = vmatpush1.msra.mxu0 0.0
        %491 = vmatprep.subr.mxu0 0.0
        %492 = vmatpush1.msra.mxu0 %v369
        %493 = vmatprep.subr.mxu0 0.0
        %494 = vmatpush1.msra.mxu0 %v368
        %495 = vmatprep.subr.mxu0 0.0
        %496 = vmatpush2.msra.mxu0 0.0
        %497 = vmatprep.subr.mxu0 0.0
        %498 = vmatpush2.msra.mxu0 0.0
        %499 = vmatprep.subr.mxu0 0.0
        %500 = vmatpush2.msra.mxu0 0.0
        %501 = vmatprep.subr.mxu0 0.0
        %502 = vmatpush2.msra.mxu0 0.0
        %503 = vmatprep.subr.mxu0 0.0
        %504 = vmatpush2.msra.mxu0 0.0
        %505 = vmatprep.subr.mxu0 0.0
        %506 = vmatpush2.msra.mxu0 0.0
        %507 = vmatprep.subr.mxu0 0.0
        %508 = vmatpush2.msra.mxu0 0.0
        %509 = vmatprep.subr.mxu0 0.0
        %510 = vmatpush2.msra.mxu0 0.0
        %511 = vmatprep.subr.mxu0 0.0
        %512 = vmatpush2.msra.mxu0 0.0
        %513 = vmatprep.subr.mxu0 0.0
        %514 = vmatpush2.msra.mxu0 0.0
        %515 = vmatprep.subr.mxu0 0.0
        %516 = vmatpush2.msra.mxu0 0.0
        %517 = vmatprep.subr.mxu0 0.0
        %518 = vmatpush2.msra.mxu0 0.0
        %519 = vmatprep.subr.mxu0 0.0
        %520 = vmatpush2.msra.mxu0 0.0
        %521 = vmatprep.subr.mxu0 0.0
        %522 = vmatpush2.msra.mxu0 0.0
        %523 = vmatprep.subr.mxu0 0.0
        %524 = vmatpush2.msra.mxu0 0.0
        %525 = vmatprep.subr.mxu0 0.0
        %526 = vmatpush2.msra.mxu0 0.0
        %527 = vmatprep.mubr.f32.mxu0 0.0
        %528 = vmatmul.mubr.f32.gmra.mxu0 %v375
        %v529 = vpop.f32.mrf.mxu0
        %v530 = vadd.f32 0.0, %v529
        %v531 = vpop.f32.mrf.mxu0
        %532 = vmatprep.mubr.f32.mxu0 0.0
        %533 = vmatmul.mubr.f32.gmra.mxu0 %v378
        %v534 = vpop.f32.mrf.mxu0
        %v535 = vadd.f32 0.0, %v534
        %v536 = vpop.f32.mrf.mxu0
        %537 = vmatprep.mubr.f32.mxu0 0.0
        %538 = vmatmul.mubr.f32.gmra.mxu0 %v381
        %v539 = vpop.f32.mrf.mxu0
        %v540 = vadd.f32 0.0, %v539
        %v541 = vpop.f32.mrf.mxu0
        %542 = vdwg.mxu0
        %v543 = vmul.f32 %v450, %v450
        %v544 = vmul.f32 %v455, %v455
        %v545 = vmul.f32 %v460, %v460
        %vm548 = vcmask 1046528
        %v549 = vrot.slane %v544, 1
        %v550 = vrot.slane %v545, 1
        %v551 = vsel %vm548, %v549, %v550
        %v554 = vadd.f32 %v543, %v551
        %v555 = vadd.f32 %v544, %v550
        %v556 = vadd.f32 %v554, 1e-08
        %v557 = vadd.f32 %v555, 1e-08
        %v558 = vrsqrt.pop %v556
        %v559 = vmul.f32 %v556, %v558
        %vm560 = vcmp.eq.f32.partialorder %v556, inf
        %v561 = vsel %vm560, %v556, %v559
        %vm562 = vcmp.eq.f32.partialorder %v556, 0.0
        %v563 = vand.u32 %v556, 2147483648
        %v564 = vsel %vm562, %v563, %v561
        %v565 = vrsqrt.pop %v557
        %v566 = vmul.f32 %v557, %v565
        %vm567 = vcmp.eq.f32.partialorder %v557, inf
        %v568 = vsel %vm567, %v557, %v566
        %vm569 = vcmp.eq.f32.partialorder %v557, 0.0
        %v570 = vand.u32 %v557, 2147483648
        %v571 = vsel %vm569, %v570, %v568
        %v572 = vmul.f32 %v530, %v530
        %v573 = vmul.f32 %v535, %v535
        %v574 = vmul.f32 %v540, %v540
        %v577 = vrot.slane %v573, 1
        %v578 = vrot.slane %v574, 1
        %v579 = vsel %vm548, %v577, %v578
        %v582 = vadd.f32 %v572, %v579
        %v583 = vadd.f32 %v573, %v578
        %v584 = vadd.f32 %v582, 1e-08
        %v585 = vadd.f32 %v583, 1e-08
        %v586 = vrsqrt.pop %v584
        %v587 = vmul.f32 %v584, %v586
        %vm588 = vcmp.eq.f32.partialorder %v584, inf
        %v589 = vsel %vm588, %v584, %v587
        %vm590 = vcmp.eq.f32.partialorder %v584, 0.0
        %v591 = vand.u32 %v584, 2147483648
        %v592 = vsel %vm590, %v591, %v589
        %v593 = vrsqrt.pop %v585
        %v594 = vmul.f32 %v585, %v593
        %vm595 = vcmp.eq.f32.partialorder %v585, inf
        %v596 = vsel %vm595, %v585, %v594
        %vm597 = vcmp.eq.f32.partialorder %v585, 0.0
        %v598 = vand.u32 %v585, 2147483648
        %v599 = vsel %vm597, %v598, %v596
        %v600 = vld [vmem:[%s6] sm:$0xff]
        %v601 = vld [vmem:[%s6 + $0x8] sm:$0xff]
        %v602 = vld [vmem:[%s6 + $0x10] sm:$0x3]
        %v603 = vld [vmem:[%s7] sm:$0x7]
        %vm606 = vcmask 1040384
        %v607 = vrot.slane %v592, 7
        %v608 = vrot.slane %v599, 7
        %v609 = vsel %vm606, %v607, %v608
        %v612 = vsel %vm606, %v571, %v607
        %vm613 = vcmask 531456
        %v614 = vsel %vm613, %v564, 0.0
        %v615 = vsel %vm613, %v612, 0.0
        %v616 = vadd.f32 %v614, %v615
        %vm617 = vcmask 525312
        %v618 = vsel %vm617, %v609, 0.0
        %v619 = vadd.f32 %v616, %v618
        %620 = vadd.xlane.f32.xlu0 %v619
        %v621 = vpop.xlane.xlu0 %620
        %v622 = vrot.slane %v621, 4
        %v623 = vadd.f32 %v621, %v622
        %v624 = vrot.slane %v623, 2
        %v625 = vadd.f32 %v623, %v624
        %v626 = vrot.slane %v625, 1
        %v627 = vadd.f32 %v625, %v626
        %s628 = vtos %v627
        %v629 = vmul.f32 %v564, %v564
        %v630 = vmul.f32 %v612, %v612
        %v631 = vmul.f32 %v609, %v609
        %v632 = vsel %vm613, %v629, 0.0
        %v633 = vsel %vm613, %v630, 0.0
        %v634 = vadd.f32 %v632, %v633
        %v635 = vsel %vm617, %v631, 0.0
        %v636 = vadd.f32 %v634, %v635
        %637 = vadd.xlane.f32.xlu0 %v636
        %v638 = vpop.xlane.xlu0 %637
        %v639 = vrot.slane %v638, 4
        %v640 = vadd.f32 %v638, %v639
        %v641 = vrot.slane %v640, 2
        %v642 = vadd.f32 %v640, %v641
        %v643 = vrot.slane %v642, 1
        %v644 = vadd.f32 %v642, %v643
        %s645 = vtos %v644
        %v646 = vrcp.pop 1170.0
        %s647 = vtos %v646
        %s648 = smul.f32 %s628, %s647
        %v649 = vrcp.pop 1170.0
        %s650 = vtos %v649
        %s651 = smul.f32 %s645, %s650
        %s652 = smul.f32 %s648, %s648
        %s653 = ssub.f32 %s651, %s652
        %s654 = sadd.f32 %s653, 1e-05
        %v655 = vstv %s654
        %v656 = vrsqrt.pop %v655
        %s657 = vtos %v656
        %v658 = vstv %s648
        %v659 = vsub.f32 %v564, %v658
        %v660 = vsub.f32 %v612, %v658
        %v661 = vsub.f32 %v609, %v658
        %v662 = vstv %s657
        %v663 = vmul.f32 %v659, %v662
        %v664 = vmul.f32 %v660, %v662
        %v665 = vmul.f32 %v661, %v662
        %667 = vset.pattern.permute.xlu0 0
        %668 = vperm.xlu0 %667, %v600
        %v669 = vpop.permute.xlu0 %668
        %672 = vset.pattern.permute.xlu0 0
        %673 = vperm.xlu0 %672, %v601
        %v674 = vpop.permute.xlu0 %673
        %677 = vset.pattern.permute.xlu0 0
        %678 = vperm.xlu0 %677, %v602
        %v679 = vpop.permute.xlu0 %678
        %v681 = vmul.f32 %v669, %v663
        %v682 = vmul.f32 %v674, %v664
        %v683 = vmul.f32 %v679, %v665
        %684 = vset.pattern.permute.xlu0 1
        %685 = vperm.xlu0 %684, %v600
        %v686 = vpop.permute.xlu0 %685
        %688 = vset.pattern.permute.xlu0 1
        %689 = vperm.xlu0 %688, %v601
        %v690 = vpop.permute.xlu0 %689
        %692 = vset.pattern.permute.xlu0 1
        %693 = vperm.xlu0 %692, %v602
        %v694 = vpop.permute.xlu0 %693
        %v696 = vadd.f32 %v681, %v686
        %v697 = vadd.f32 %v682, %v690
        %v698 = vadd.f32 %v683, %v694
        %v699 = vld [vmem:[#allocation9] sm:$0xff]
        %v700 = vld [vmem:[#allocation9 + $0x8] sm:$0xff]
        %701 = vset.pattern.permute.xlu0 2
        %702 = vperm.xlu0 %701, %v600
        %v703 = vpop.permute.xlu0 %702
        %705 = vset.pattern.permute.xlu0 2
        %706 = vperm.xlu0 %705, %v601
        %v707 = vpop.permute.xlu0 %706
        %vm709 = vcmask 146432
        %v711 = vsel %vm709, %v699, 0
        %v714 = vsel %vm709, %v700, 0
        %vm716 = vcmask 1041408
        %v718 = vsel %vm716, %v698, 0
        %720 = vmatprep.subr.mxu0 0.0
        %721 = vmatpush1.msra.mxu0 0.0
        %722 = vmatprep.subr.mxu0 0.0
        %723 = vmatpush1.msra.mxu0 0.0
        %724 = vmatprep.subr.mxu0 0.0
        %725 = vmatpush1.msra.mxu0 0.0
        %726 = vmatprep.subr.mxu0 0.0
        %727 = vmatpush1.msra.mxu0 0.0
        %728 = vmatprep.subr.mxu0 0.0
        %729 = vmatpush1.msra.mxu0 0.0
        %730 = vmatprep.subr.mxu0 0.0
        %731 = vmatpush1.msra.mxu0 0.0
        %732 = vmatprep.subr.mxu0 0.0
        %733 = vmatpush1.msra.mxu0 0.0
        %734 = vmatprep.subr.mxu0 0.0
        %735 = vmatpush1.msra.mxu0 0.0
        %736 = vmatprep.subr.mxu0 0.0
        %737 = vmatpush1.msra.mxu0 0.0
        %738 = vmatprep.subr.mxu0 0.0
        %739 = vmatpush1.msra.mxu0 0.0
        %740 = vmatprep.subr.mxu0 0.0
        %741 = vmatpush1.msra.mxu0 0.0
        %742 = vmatprep.subr.mxu0 0.0
        %743 = vmatpush1.msra.mxu0 0.0
        %744 = vmatprep.subr.mxu0 0.0
        %745 = vmatpush1.msra.mxu0 0.0
        %746 = vmatprep.subr.mxu0 0.0
        %747 = vmatpush1.msra.mxu0 %v718
        %748 = vmatprep.subr.mxu0 0.0
        %749 = vmatpush1.msra.mxu0 %v697
        %750 = vmatprep.subr.mxu0 0.0
        %751 = vmatpush1.msra.mxu0 %v696
        %752 = vmatprep.subr.mxu0 0.0
        %753 = vmatpush2.msra.mxu0 0.0
        %754 = vmatprep.subr.mxu0 0.0
        %755 = vmatpush2.msra.mxu0 0.0
        %756 = vmatprep.subr.mxu0 0.0
        %757 = vmatpush2.msra.mxu0 0.0
        %758 = vmatprep.subr.mxu0 0.0
        %759 = vmatpush2.msra.mxu0 0.0
        %760 = vmatprep.subr.mxu0 0.0
        %761 = vmatpush2.msra.mxu0 0.0
        %762 = vmatprep.subr.mxu0 0.0
        %763 = vmatpush2.msra.mxu0 0.0
        %764 = vmatprep.subr.mxu0 0.0
        %765 = vmatpush2.msra.mxu0 0.0
        %766 = vmatprep.subr.mxu0 0.0
        %767 = vmatpush2.msra.mxu0 0.0
        %768 = vmatprep.subr.mxu0 0.0
        %769 = vmatpush2.msra.mxu0 0.0
        %770 = vmatprep.subr.mxu0 0.0
        %771 = vmatpush2.msra.mxu0 0.0
        %772 = vmatprep.subr.mxu0 0.0
        %773 = vmatpush2.msra.mxu0 0.0
        %774 = vmatprep.subr.mxu0 0.0
        %775 = vmatpush2.msra.mxu0 0.0
        %776 = vmatprep.subr.mxu0 0.0
        %777 = vmatpush2.msra.mxu0 0.0
        %778 = vmatprep.subr.mxu0 0.0
        %779 = vmatpush2.msra.mxu0 0.0
        %780 = vmatprep.subr.mxu0 0.0
        %781 = vmatpush2.msra.mxu0 0.0
        %782 = vmatprep.subr.mxu0 0.0
        %783 = vmatpush2.msra.mxu0 0.0
        %784 = vmatprep.mubr.f32.mxu0 0.0
        %785 = vmatmul.mubr.f32.gmra.mxu0 %v711
        %v786 = vpop.f32.mrf.mxu0
        %v787 = vadd.f32 %v703, %v786
        %v788 = vpop.f32.mrf.mxu0
        %789 = vmatprep.mubr.f32.mxu0 0.0
        %790 = vmatmul.mubr.f32.gmra.mxu0 %v714
        %v791 = vpop.f32.mrf.mxu0
        %v792 = vadd.f32 %v707, %v791
        %v793 = vpop.f32.mrf.mxu0
        %794 = vdwg.mxu0
        %v795 = vsel %vm613, %v787, 0.0
        %v796 = vsel %vm613, %v792, 0.0
        %v797 = vadd.f32 %v795, %v796
        %798 = vadd.xlane.f32.xlu0 %v797
        %v799 = vpop.xlane.xlu0 %798
        %v800 = vrot.slane %v799, 4
        %v801 = vadd.f32 %v799, %v800
        %v802 = vrot.slane %v801, 2
        %v803 = vadd.f32 %v801, %v802
        %v804 = vrot.slane %v803, 1
        %v805 = vadd.f32 %v803, %v804
        %s806 = vtos %v805
        %v807 = vmul.f32 %v787, %v787
        %v808 = vmul.f32 %v792, %v792
        %v809 = vsel %vm613, %v807, 0.0
        %v810 = vsel %vm613, %v808, 0.0
        %v811 = vadd.f32 %v809, %v810
        %812 = vadd.xlane.f32.xlu0 %v811
        %v813 = vpop.xlane.xlu0 %812
        %v814 = vrot.slane %v813, 4
        %v815 = vadd.f32 %v813, %v814
        %v816 = vrot.slane %v815, 2
        %v817 = vadd.f32 %v815, %v816
        %v818 = vrot.slane %v817, 1
        %v819 = vadd.f32 %v817, %v818
        %s820 = vtos %v819
        %v821 = vrcp.pop 1040.0
        %s822 = vtos %v821
        %s823 = smul.f32 %s806, %s822
        %v824 = vrcp.pop 1040.0
        %s825 = vtos %v824
        %s826 = smul.f32 %s820, %s825
        %s827 = smul.f32 %s823, %s823
        %s828 = ssub.f32 %s826, %s827
        %s829 = sadd.f32 %s828, 1e-05
        %v830 = vstv %s829
        %v831 = vrsqrt.pop %v830
        %s832 = vtos %v831
        %v833 = vstv %s823
        %v834 = vsub.f32 %v787, %v833
        %v835 = vsub.f32 %v792, %v833
        %v836 = vstv %s832
        %v837 = vmul.f32 %v834, %v836
        %v838 = vmul.f32 %v835, %v836
        %839 = vset.pattern.permute.xlu0 3
        %840 = vperm.xlu0 %839, %v600
        %v841 = vpop.permute.xlu0 %840
        %843 = vset.pattern.permute.xlu0 3
        %844 = vperm.xlu0 %843, %v601
        %v845 = vpop.permute.xlu0 %844
        %v847 = vmul.f32 %v841, %v837
        %v848 = vmul.f32 %v845, %v838
        %849 = vset.pattern.permute.xlu0 4
        %850 = vperm.xlu0 %849, %v600
        %v851 = vpop.permute.xlu0 %850
        %853 = vset.pattern.permute.xlu0 4
        %854 = vperm.xlu0 %853, %v601
        %v855 = vpop.permute.xlu0 %854
        %v857 = vadd.f32 %v847, %v851
        %v858 = vadd.f32 %v848, %v855
        %861 = vrot.lane.b32.xlu0 %v857, 1
        %v862 = vpop.permute.xlu0 %861
        %863 = vrot.lane.b32.xlu0 %v858, 1
        %v864 = vpop.permute.xlu0 %863
        %vm867 = vcmask 7168
        %v868 = vsel %vm867, 0.0, %v862
        %v869 = vsel %vm867, 0.0, %v864
        %870 = vrot.lane.b32.xlu0 %v857, 127
        %v871 = vpop.permute.xlu0 %870
        %872 = vrot.lane.b32.xlu0 %v858, 127
        %v873 = vpop.permute.xlu0 %872
        %vm876 = vcmask 523264
        %v877 = vsel %vm876, %v871, 0.0
        %v878 = vsel %vm876, %v873, 0.0
        %s879 = scalar_lea.vmem [#allocation9], 16
        %v880 = vld [vmem:[%s879] sm:$0xff]
        %v881 = vld [vmem:[%s879 + $0x8] sm:$0xff]
        %882 = vset.pattern.permute.xlu0 5
        %883 = vperm.xlu0 %882, %v600
        %v884 = vpop.permute.xlu0 %883
        %886 = vset.pattern.permute.xlu0 5
        %887 = vperm.xlu0 %886, %v601
        %v888 = vpop.permute.xlu0 %887
        %vm890 = vcmask 392192
        %v892 = vsel %vm890, %v880, 0
        %v895 = vsel %vm890, %v881, 0
        %897 = vmatprep.subr.mxu0 0.0
        %898 = vmatpush1.msra.mxu0 0.0
        %899 = vmatprep.subr.mxu0 0.0
        %900 = vmatpush1.msra.mxu0 0.0
        %901 = vmatprep.subr.mxu0 0.0
        %902 = vmatpush1.msra.mxu0 0.0
        %903 = vmatprep.subr.mxu0 0.0
        %904 = vmatpush1.msra.mxu0 0.0
        %905 = vmatprep.subr.mxu0 0.0
        %906 = vmatpush1.msra.mxu0 0.0
        %907 = vmatprep.subr.mxu0 0.0
        %908 = vmatpush1.msra.mxu0 0.0
        %909 = vmatprep.subr.mxu0 0.0
        %910 = vmatpush1.msra.mxu0 0.0
        %911 = vmatprep.subr.mxu0 0.0
        %912 = vmatpush1.msra.mxu0 0.0
        %913 = vmatprep.subr.mxu0 0.0
        %914 = vmatpush1.msra.mxu0 0.0
        %915 = vmatprep.subr.mxu0 0.0
        %916 = vmatpush1.msra.mxu0 0.0
        %917 = vmatprep.subr.mxu0 0.0
        %918 = vmatpush1.msra.mxu0 %v878
        %919 = vmatprep.subr.mxu0 0.0
        %920 = vmatpush1.msra.mxu0 %v877
        %921 = vmatprep.subr.mxu0 0.0
        %922 = vmatpush1.msra.mxu0 %v858
        %923 = vmatprep.subr.mxu0 0.0
        %924 = vmatpush1.msra.mxu0 %v857
        %925 = vmatprep.subr.mxu0 0.0
        %926 = vmatpush1.msra.mxu0 %v869
        %927 = vmatprep.subr.mxu0 0.0
        %928 = vmatpush1.msra.mxu0 %v868
        %929 = vmatprep.subr.mxu0 0.0
        %930 = vmatpush2.msra.mxu0 0.0
        %931 = vmatprep.subr.mxu0 0.0
        %932 = vmatpush2.msra.mxu0 0.0
        %933 = vmatprep.subr.mxu0 0.0
        %934 = vmatpush2.msra.mxu0 0.0
        %935 = vmatprep.subr.mxu0 0.0
        %936 = vmatpush2.msra.mxu0 0.0
        %937 = vmatprep.subr.mxu0 0.0
        %938 = vmatpush2.msra.mxu0 0.0
        %939 = vmatprep.subr.mxu0 0.0
        %940 = vmatpush2.msra.mxu0 0.0
        %941 = vmatprep.subr.mxu0 0.0
        %942 = vmatpush2.msra.mxu0 0.0
        %943 = vmatprep.subr.mxu0 0.0
        %944 = vmatpush2.msra.mxu0 0.0
        %945 = vmatprep.subr.mxu0 0.0
        %946 = vmatpush2.msra.mxu0 0.0
        %947 = vmatprep.subr.mxu0 0.0
        %948 = vmatpush2.msra.mxu0 0.0
        %949 = vmatprep.subr.mxu0 0.0
        %950 = vmatpush2.msra.mxu0 0.0
        %951 = vmatprep.subr.mxu0 0.0
        %952 = vmatpush2.msra.mxu0 0.0
        %953 = vmatprep.subr.mxu0 0.0
        %954 = vmatpush2.msra.mxu0 0.0
        %955 = vmatprep.subr.mxu0 0.0
        %956 = vmatpush2.msra.mxu0 0.0
        %957 = vmatprep.subr.mxu0 0.0
        %958 = vmatpush2.msra.mxu0 0.0
        %959 = vmatprep.subr.mxu0 0.0
        %960 = vmatpush2.msra.mxu0 0.0
        %961 = vmatprep.mubr.f32.mxu0 0.0
        %962 = vmatmul.mubr.f32.gmra.mxu0 %v892
        %v963 = vpop.f32.mrf.mxu0
        %v964 = vadd.f32 %v884, %v963
        %v965 = vpop.f32.mrf.mxu0
        %966 = vmatprep.mubr.f32.mxu0 0.0
        %967 = vmatmul.mubr.f32.gmra.mxu0 %v895
        %v968 = vpop.f32.mrf.mxu0
        %v969 = vadd.f32 %v888, %v968
        %v970 = vpop.f32.mrf.mxu0
        %971 = vdwg.mxu0
        %972 = vxpose.xlu0.b32.start [1/16] %v964, 128
        %973 = vxpose.xlu0.b32.cont [2/16] %v969, 128
        %974 = vxpose.xlu0.b32.cont [3/16] 0.0, 128
        %975 = vxpose.xlu0.b32.cont [4/16] 0.0, 128
        %976 = vxpose.xlu0.b32.cont [5/16] 0.0, 128
        %977 = vxpose.xlu0.b32.cont [6/16] 0.0, 128
        %978 = vxpose.xlu0.b32.cont [7/16] 0.0, 128
        %979 = vxpose.xlu0.b32.cont [8/16] 0.0, 128
        %980 = vxpose.xlu0.b32.cont [9/16] 0.0, 128
        %981 = vxpose.xlu0.b32.cont [10/16] 0.0, 128
        %982 = vxpose.xlu0.b32.cont [11/16] 0.0, 128
        %983 = vxpose.xlu0.b32.cont [12/16] 0.0, 128
        %984 = vxpose.xlu0.b32.cont [13/16] 0.0, 128
        %985 = vxpose.xlu0.b32.cont [14/16] 0.0, 128
        %986 = vxpose.xlu0.b32.cont [15/16] 0.0, 128
        %987 = vxpose.xlu0.b32.end [16/16] 0.0, 128
        %v988 = vpop.trf.xlu0
        %v989 = vpop.trf.xlu0
        %v990 = vpop.trf.xlu0
        %v991 = vpop.trf.xlu0
        %v992 = vpop.trf.xlu0
        %v993 = vpop.trf.xlu0
        %v994 = vpop.trf.xlu0
        %v995 = vpop.trf.xlu0
        %v996 = vpop.trf.xlu0
        %v997 = vpop.trf.xlu0
        %v998 = vpop.trf.xlu0
        %v999 = vpop.trf.xlu0
        %v1000 = vpop.trf.xlu0
        %v1001 = vpop.trf.xlu0
        %v1002 = vpop.trf.xlu0
        %v1003 = vpop.trf.xlu0
        %s1004 = scalar_lea.vmem [#allocation9], 32
        %v1005 = vld [vmem:[%s1004] sm:$0xff]
        %v1006 = vld [vmem:[%s1004 + $0x8] sm:$0xff]
        %v1007 = vlaneseq
        %v1008 = vshrl.u32 %v1007, 7
        %v1009 = vsub.s32 0, %v1008
        %v1010 = vrot.slane %v603, %v1009
        %v1012 = vsel %vm373, %v988, 0
        %v1015 = vsel %vm373, %v989, 0
        %v1018 = vsel %vm373, %v990, 0
        %v1021 = vsel %vm373, %v991, 0
        %v1024 = vsel %vm373, %v992, 0
        %v1027 = vsel %vm373, %v993, 0
        %v1030 = vsel %vm373, %v994, 0
        %v1033 = vsel %vm373, %v995, 0
        %v1036 = vsel %vm373, %v996, 0
        %1038 = vmatprep.subr.mxu0 0.0
        %1039 = vmatpush1.msra.mxu0 0.0
        %1040 = vmatprep.subr.mxu0 0.0
        %1041 = vmatpush1.msra.mxu0 0.0
        %1042 = vmatprep.subr.mxu0 0.0
        %1043 = vmatpush1.msra.mxu0 0.0
        %1044 = vmatprep.subr.mxu0 0.0
        %1045 = vmatpush1.msra.mxu0 0.0
        %1046 = vmatprep.subr.mxu0 0.0
        %1047 = vmatpush1.msra.mxu0 0.0
        %1048 = vmatprep.subr.mxu0 0.0
        %1049 = vmatpush1.msra.mxu0 0.0
        %1050 = vmatprep.subr.mxu0 0.0
        %1051 = vmatpush1.msra.mxu0 0.0
        %1052 = vmatprep.subr.mxu0 0.0
        %1053 = vmatpush1.msra.mxu0 0.0
        %1054 = vmatprep.subr.mxu0 0.0
        %1055 = vmatpush1.msra.mxu0 0.0
        %1056 = vmatprep.subr.mxu0 0.0
        %1057 = vmatpush1.msra.mxu0 0.0
        %1058 = vmatprep.subr.mxu0 0.0
        %1059 = vmatpush1.msra.mxu0 0.0
        %1060 = vmatprep.subr.mxu0 0.0
        %1061 = vmatpush1.msra.mxu0 0.0
        %1062 = vmatprep.subr.mxu0 0.0
        %1063 = vmatpush1.msra.mxu0 0.0
        %1064 = vmatprep.subr.mxu0 0.0
        %1065 = vmatpush1.msra.mxu0 0.0
        %1066 = vmatprep.subr.mxu0 0.0
        %1067 = vmatpush1.msra.mxu0 %v1006
        %1068 = vmatprep.subr.mxu0 0.0
        %1069 = vmatpush1.msra.mxu0 %v1005
        %1070 = vmatprep.subr.mxu0 0.0
        %1071 = vmatpush2.msra.mxu0 0.0
        %1072 = vmatprep.subr.mxu0 0.0
        %1073 = vmatpush2.msra.mxu0 0.0
        %1074 = vmatprep.subr.mxu0 0.0
        %1075 = vmatpush2.msra.mxu0 0.0
        %1076 = vmatprep.subr.mxu0 0.0
        %1077 = vmatpush2.msra.mxu0 0.0
        %1078 = vmatprep.subr.mxu0 0.0
        %1079 = vmatpush2.msra.mxu0 0.0
        %1080 = vmatprep.subr.mxu0 0.0
        %1081 = vmatpush2.msra.mxu0 0.0
        %1082 = vmatprep.subr.mxu0 0.0
        %1083 = vmatpush2.msra.mxu0 0.0
        %1084 = vmatprep.subr.mxu0 0.0
        %1085 = vmatpush2.msra.mxu0 0.0
        %1086 = vmatprep.subr.mxu0 0.0
        %1087 = vmatpush2.msra.mxu0 0.0
        %1088 = vmatprep.subr.mxu0 0.0
        %1089 = vmatpush2.msra.mxu0 0.0
        %1090 = vmatprep.subr.mxu0 0.0
        %1091 = vmatpush2.msra.mxu0 0.0
        %1092 = vmatprep.subr.mxu0 0.0
        %1093 = vmatpush2.msra.mxu0 0.0
        %1094 = vmatprep.subr.mxu0 0.0
        %1095 = vmatpush2.msra.mxu0 0.0
        %1096 = vmatprep.subr.mxu0 0.0
        %1097 = vmatpush2.msra.mxu0 0.0
        %1098 = vmatprep.subr.mxu0 0.0
        %1099 = vmatpush2.msra.mxu0 0.0
        %1100 = vmatprep.subr.mxu0 0.0
        %1101 = vmatpush2.msra.mxu0 0.0
        %1102 = vmatprep.mubr.f32.mxu0 0.0
        %1103 = vmatmul.mubr.f32.gmra.mxu0 %v1012
        %v1104 = vpop.f32.mrf.mxu0
        %v1105 = vadd.f32 %v1010, %v1104
        %v1106 = vpop.f32.mrf.mxu0
        %1107 = vmatprep.mubr.f32.mxu0 0.0
        %1108 = vmatmul.mubr.f32.gmra.mxu0 %v1015
        %v1109 = vpop.f32.mrf.mxu0
        %v1110 = vadd.f32 %v1010, %v1109
        %v1111 = vpop.f32.mrf.mxu0
        %1112 = vmatprep.mubr.f32.mxu0 0.0
        %1113 = vmatmul.mubr.f32.gmra.mxu0 %v1018
        %v1114 = vpop.f32.mrf.mxu0
        %v1115 = vadd.f32 %v1010, %v1114
        %v1116 = vpop.f32.mrf.mxu0
        %1117 = vmatprep.mubr.f32.mxu0 0.0
        %1118 = vmatmul.mubr.f32.gmra.mxu0 %v1021
        %v1119 = vpop.f32.mrf.mxu0
        %v1120 = vadd.f32 %v1010, %v1119
        %v1121 = vpop.f32.mrf.mxu0
        %1122 = vmatprep.mubr.f32.mxu0 0.0
        %1123 = vmatmul.mubr.f32.gmra.mxu0 %v1024
        %v1124 = vpop.f32.mrf.mxu0
        %v1125 = vadd.f32 %v1010, %v1124
        %v1126 = vpop.f32.mrf.mxu0
        %1127 = vmatprep.mubr.f32.mxu0 0.0
        %1128 = vmatmul.mubr.f32.gmra.mxu0 %v1027
        %v1129 = vpop.f32.mrf.mxu0
        %v1130 = vadd.f32 %v1010, %v1129
        %v1131 = vpop.f32.mrf.mxu0
        %1132 = vmatprep.mubr.f32.mxu0 0.0
        %1133 = vmatmul.mubr.f32.gmra.mxu0 %v1030
        %v1134 = vpop.f32.mrf.mxu0
        %v1135 = vadd.f32 %v1010, %v1134
        %v1136 = vpop.f32.mrf.mxu0
        %1137 = vmatprep.mubr.f32.mxu0 0.0
        %1138 = vmatmul.mubr.f32.gmra.mxu0 %v1033
        %v1139 = vpop.f32.mrf.mxu0
        %v1140 = vadd.f32 %v1010, %v1139
        %v1141 = vpop.f32.mrf.mxu0
        %1142 = vmatprep.mubr.f32.mxu0 0.0
        %1143 = vmatmul.mubr.f32.gmra.mxu0 %v1036
        %v1144 = vpop.f32.mrf.mxu0
        %v1145 = vadd.f32 %v1010, %v1144
        %v1146 = vpop.f32.mrf.mxu0
        %1147 = vdwg.mxu0
        %1148 = vst.msk [vmem:[#allocation2] sm:$0xff] %vm890, %v1105
        %1149 = vst.msk [vmem:[#allocation2 + $0x8] sm:$0xff] %vm890, %v1110
        %1150 = vst.msk [vmem:[#allocation2 + $0x10] sm:$0xff] %vm890, %v1115
        %1151 = vst.msk [vmem:[#allocation2 + $0x18] sm:$0xff] %vm890, %v1120
        %1152 = vst.msk [vmem:[#allocation2 + $0x20] sm:$0xff] %vm890, %v1125
        %1153 = vst.msk [vmem:[#allocation2 + $0x28] sm:$0xff] %vm890, %v1130
        %1154 = vst.msk [vmem:[#allocation2 + $0x30] sm:$0xff] %vm890, %v1135
        %1155 = vst.msk [vmem:[#allocation2 + $0x38] sm:$0xff] %vm890, %v1140
        %vm1156 = vcmask 385024
        %1157 = vst.msk [vmem:[#allocation2 + $0x40] sm:$0x1] %vm1156, %v1145
        %s1158 = scalar_lea.vmem [#allocation9], 48
        %v1159 = vld [vmem:[%s1158] sm:$0xff]
        %v1160 = vld [vmem:[%s1158 + $0x8] sm:$0xff]
        %s1161 = scalar_lea.vmem [#allocation9], 64
        %v1162 = vld [vmem:[%s1161] sm:$0xff]
        %v1163 = vld [vmem:[%s1161 + $0x8] sm:$0xff]
        %v1165 = vrot.slane %v603, 1
        loop: start=0, step=1, limit=65
        $region65: #{tpu_custom_call.1} parent=51 // loop_pre_header
          _
        $region66: #{tpu_custom_call.1} parent=51 // loop_header
          %s1168 = sphi 0, %s1172
          %p1169 = scmp.ge.s32.totalorder %s1168, 65
          %v1173 = vphi 0.0, %v1203
          %v1174 = vphi 0.0, %v1384
          %v1175 = vphi %v1165, %v1276
        $region67: #{tpu_custom_call.1} parent=51 // loop_header_branch
          %1171 = sbr.rel (%p1169) target = $region71
        $region68: #{tpu_custom_call.1} parent=51 // loop_body
          %s1176 = scalar_lea.vmem [#allocation2], %s1168
          %v1177 = vld [vmem:[%s1176] sm:$0x1]
          %v1178 = vadd.f32 %v1177, %v1175
          %v1179 = vxor.u32 %v1178, 2147483648
          %v1180 = vmul.f32 %v1179, 1.442695
          %v1181 = vpow.pop %v1180
          %v1182 = vadd.f32 %v1181, 1.0
          %v1183 = vrcp.pop %v1182
          %v1184 = vmul.f32 1.0, %v1183
          %1186 = vrot.lane.b32.xlu0 %v1175, 96
          %v1187 = vpop.permute.xlu0 %1186
          %v1189 = vmul.f32 %v1184, %v1187
          %1191 = vrot.lane.b32.xlu0 %v1189, 32
          %v1192 = vpop.permute.xlu0 %1191
          %v1194 = vadd.f32 %v1177, %v1192
          %v1195 = vtanh.pop %v1194
          %v1196 = vsub.f32 1.0, %v1184
          %1198 = vrot.lane.b32.xlu0 %v1195, 112
          %v1199 = vpop.permute.xlu0 %1198
          %v1201 = vmul.f32 %v1196, %v1199
          %v1202 = vmul.f32 %v1184, %v1173
          %v1203 = vadd.f32 %v1201, %v1202
          %1205 = vrot.lane.b32.xlu0 %v1203, 112
          %v1206 = vpop.permute.xlu0 %1205
          %v1207 = vsel %vm373, %v1206, 0
          %1209 = vmatprep.subr.mxu0 0.0
          %1210 = vmatpush1.msra.mxu0 0.0
          %1211 = vmatprep.subr.mxu0 0.0
          %1212 = vmatpush1.msra.mxu0 0.0
          %1213 = vmatprep.subr.mxu0 0.0
          %1214 = vmatpush1.msra.mxu0 0.0
          %1215 = vmatprep.subr.mxu0 0.0
          %1216 = vmatpush1.msra.mxu0 0.0
          %1217 = vmatprep.subr.mxu0 0.0
          %1218 = vmatpush1.msra.mxu0 0.0
          %1219 = vmatprep.subr.mxu0 0.0
          %1220 = vmatpush1.msra.mxu0 0.0
          %1221 = vmatprep.subr.mxu0 0.0
          %1222 = vmatpush1.msra.mxu0 0.0
          %1223 = vmatprep.subr.mxu0 0.0
          %1224 = vmatpush1.msra.mxu0 0.0
          %1225 = vmatprep.subr.mxu0 0.0
          %1226 = vmatpush1.msra.mxu0 0.0
          %1227 = vmatprep.subr.mxu0 0.0
          %1228 = vmatpush1.msra.mxu0 0.0
          %1229 = vmatprep.subr.mxu0 0.0
          %1230 = vmatpush1.msra.mxu0 0.0
          %1231 = vmatprep.subr.mxu0 0.0
          %1232 = vmatpush1.msra.mxu0 0.0
          %1233 = vmatprep.subr.mxu0 0.0
          %1234 = vmatpush1.msra.mxu0 0.0
          %1235 = vmatprep.subr.mxu0 0.0
          %1236 = vmatpush1.msra.mxu0 0.0
          %1237 = vmatprep.subr.mxu0 0.0
          %1238 = vmatpush1.msra.mxu0 %v1160
          %1239 = vmatprep.subr.mxu0 0.0
          %1240 = vmatpush1.msra.mxu0 %v1159
          %1241 = vmatprep.subr.mxu0 0.0
          %1242 = vmatpush2.msra.mxu0 0.0
          %1243 = vmatprep.subr.mxu0 0.0
          %1244 = vmatpush2.msra.mxu0 0.0
          %1245 = vmatprep.subr.mxu0 0.0
          %1246 = vmatpush2.msra.mxu0 0.0
          %1247 = vmatprep.subr.mxu0 0.0
          %1248 = vmatpush2.msra.mxu0 0.0
          %1249 = vmatprep.subr.mxu0 0.0
          %1250 = vmatpush2.msra.mxu0 0.0
          %1251 = vmatprep.subr.mxu0 0.0
          %1252 = vmatpush2.msra.mxu0 0.0
          %1253 = vmatprep.subr.mxu0 0.0
          %1254 = vmatpush2.msra.mxu0 0.0
          %1255 = vmatprep.subr.mxu0 0.0
          %1256 = vmatpush2.msra.mxu0 0.0
          %1257 = vmatprep.subr.mxu0 0.0
          %1258 = vmatpush2.msra.mxu0 0.0
          %1259 = vmatprep.subr.mxu0 0.0
          %1260 = vmatpush2.msra.mxu0 0.0
          %1261 = vmatprep.subr.mxu0 0.0
          %1262 = vmatpush2.msra.mxu0 0.0
          %1263 = vmatprep.subr.mxu0 0.0
          %1264 = vmatpush2.msra.mxu0 0.0
          %1265 = vmatprep.subr.mxu0 0.0
          %1266 = vmatpush2.msra.mxu0 0.0
          %1267 = vmatprep.subr.mxu0 0.0
          %1268 = vmatpush2.msra.mxu0 0.0
          %1269 = vmatprep.subr.mxu0 0.0
          %1270 = vmatpush2.msra.mxu0 0.0
          %1271 = vmatprep.subr.mxu0 0.0
          %1272 = vmatpush2.msra.mxu0 0.0
          %1273 = vmatprep.mubr.f32.mxu0 0.0
          %1274 = vmatmul.mubr.f32.gmra.mxu0 %v1207
          %v1275 = vpop.f32.mrf.mxu0
          %v1276 = vadd.f32 %v1165, %v1275
          %v1277 = vpop.f32.mrf.mxu0
          %1278 = vdwg.mxu0
          %1280 = vrot.lane.b32.xlu0 %v1174, 64
          %v1281 = vpop.permute.xlu0 %1280
          %v1282 = vrot.slane %v603, 2
          %v1284 = vsel %vm373, %v1281, 0
          %1286 = vmatprep.subr.mxu0 0.0
          %1287 = vmatpush1.msra.mxu0 0.0
          %1288 = vmatprep.subr.mxu0 0.0
          %1289 = vmatpush1.msra.mxu0 0.0
          %1290 = vmatprep.subr.mxu0 0.0
          %1291 = vmatpush1.msra.mxu0 0.0
          %1292 = vmatprep.subr.mxu0 0.0
          %1293 = vmatpush1.msra.mxu0 0.0
          %1294 = vmatprep.subr.mxu0 0.0
          %1295 = vmatpush1.msra.mxu0 0.0
          %1296 = vmatprep.subr.mxu0 0.0
          %1297 = vmatpush1.msra.mxu0 0.0
          %1298 = vmatprep.subr.mxu0 0.0
          %1299 = vmatpush1.msra.mxu0 0.0
          %1300 = vmatprep.subr.mxu0 0.0
          %1301 = vmatpush1.msra.mxu0 0.0
          %1302 = vmatprep.subr.mxu0 0.0
          %1303 = vmatpush1.msra.mxu0 0.0
          %1304 = vmatprep.subr.mxu0 0.0
          %1305 = vmatpush1.msra.mxu0 0.0
          %1306 = vmatprep.subr.mxu0 0.0
          %1307 = vmatpush1.msra.mxu0 0.0
          %1308 = vmatprep.subr.mxu0 0.0
          %1309 = vmatpush1.msra.mxu0 0.0
          %1310 = vmatprep.subr.mxu0 0.0
          %1311 = vmatpush1.msra.mxu0 0.0
          %1312 = vmatprep.subr.mxu0 0.0
          %1313 = vmatpush1.msra.mxu0 0.0
          %1314 = vmatprep.subr.mxu0 0.0
          %1315 = vmatpush1.msra.mxu0 %v1163
          %1316 = vmatprep.subr.mxu0 0.0
          %1317 = vmatpush1.msra.mxu0 %v1162
          %1318 = vmatprep.subr.mxu0 0.0
          %1319 = vmatpush2.msra.mxu0 0.0
          %1320 = vmatprep.subr.mxu0 0.0
          %1321 = vmatpush2.msra.mxu0 0.0
          %1322 = vmatprep.subr.mxu0 0.0
          %1323 = vmatpush2.msra.mxu0 0.0
          %1324 = vmatprep.subr.mxu0 0.0
          %1325 = vmatpush2.msra.mxu0 0.0
          %1326 = vmatprep.subr.mxu0 0.0
          %1327 = vmatpush2.msra.mxu0 0.0
          %1328 = vmatprep.subr.mxu0 0.0
          %1329 = vmatpush2.msra.mxu0 0.0
          %1330 = vmatprep.subr.mxu0 0.0
          %1331 = vmatpush2.msra.mxu0 0.0
          %1332 = vmatprep.subr.mxu0 0.0
          %1333 = vmatpush2.msra.mxu0 0.0
          %1334 = vmatprep.subr.mxu0 0.0
          %1335 = vmatpush2.msra.mxu0 0.0
          %1336 = vmatprep.subr.mxu0 0.0
          %1337 = vmatpush2.msra.mxu0 0.0
          %1338 = vmatprep.subr.mxu0 0.0
          %1339 = vmatpush2.msra.mxu0 0.0
          %1340 = vmatprep.subr.mxu0 0.0
          %1341 = vmatpush2.msra.mxu0 0.0
          %1342 = vmatprep.subr.mxu0 0.0
          %1343 = vmatpush2.msra.mxu0 0.0
          %1344 = vmatprep.subr.mxu0 0.0
          %1345 = vmatpush2.msra.mxu0 0.0
          %1346 = vmatprep.subr.mxu0 0.0
          %1347 = vmatpush2.msra.mxu0 0.0
          %1348 = vmatprep.subr.mxu0 0.0
          %1349 = vmatpush2.msra.mxu0 0.0
          %1350 = vmatprep.mubr.f32.mxu0 0.0
          %1351 = vmatmul.mubr.f32.gmra.mxu0 %v1284
          %v1352 = vpop.f32.mrf.mxu0
          %v1353 = vadd.f32 %v1282, %v1352
          %v1354 = vpop.f32.mrf.mxu0
          %1355 = vdwg.mxu0
          %1357 = vrot.lane.b32.xlu0 %v1353, 48
          %v1358 = vpop.permute.xlu0 %1357
          %v1360 = vadd.f32 %v1276, %v1358
          %v1361 = vxor.u32 %v1360, 2147483648
          %v1362 = vmul.f32 %v1361, 1.442695
          %v1363 = vpow.pop %v1362
          %v1364 = vadd.f32 %v1363, 1.0
          %v1365 = vrcp.pop %v1364
          %v1366 = vmul.f32 1.0, %v1365
          %1367 = vrot.lane.b32.xlu0 %v1353, 16
          %v1368 = vpop.permute.xlu0 %1367
          %v1370 = vmul.f32 %v1366, %v1368
          %1372 = vrot.lane.b32.xlu0 %v1370, 32
          %v1373 = vpop.permute.xlu0 %1372
          %v1375 = vadd.f32 %v1276, %v1373
          %v1376 = vtanh.pop %v1375
          %v1377 = vsub.f32 1.0, %v1366
          %1379 = vrot.lane.b32.xlu0 %v1376, 112
          %v1380 = vpop.permute.xlu0 %1379
          %v1382 = vmul.f32 %v1377, %v1380
          %v1383 = vmul.f32 %v1366, %v1174
          %v1384 = vadd.f32 %v1382, %v1383
          %1386 = vrot.lane.b32.xlu0 %v1384, 64
          %v1387 = vpop.permute.xlu0 %1386
          %s1389 = scalar_lea.vmem [#allocation3], %s1168
          %vm1390 = vcmask 122880
          %1391 = vst.msk [vmem:[%s1389] sm:$0x1] %vm1390, %v1387
        $region69: #{tpu_custom_call.1} parent=51 // loop_footer
          %s1172 = sadd.s32 1, %s1168
        $region70: #{tpu_custom_call.1} parent=51 // loop_footer_branch
          %1167 = sbr.rel target = $region66
        $region71: #{tpu_custom_call.1} parent=51 // loop_exit
          _
        %v1392 = vld [vmem:[#allocation3] sm:$0xff]
        %v1393 = vld [vmem:[#allocation3 + $0x8] sm:$0xff]
        %v1394 = vld [vmem:[#allocation3 + $0x10] sm:$0xff]
        %v1395 = vld [vmem:[#allocation3 + $0x18] sm:$0xff]
        %v1396 = vld [vmem:[#allocation3 + $0x20] sm:$0xff]
        %v1397 = vld [vmem:[#allocation3 + $0x28] sm:$0xff]
        %v1398 = vld [vmem:[#allocation3 + $0x30] sm:$0xff]
        %v1399 = vld [vmem:[#allocation3 + $0x38] sm:$0xff]
        %v1400 = vld [vmem:[#allocation3 + $0x40] sm:$0x1]
        %s1401 = scalar_lea.vmem [#allocation9], 80
        %v1402 = vld [vmem:[%s1401] sm:$0xff]
        %v1403 = vld [vmem:[%s1401 + $0x8] sm:$0xff]
        %1404 = vset.pattern.permute.xlu0 6
        %1405 = vperm.xlu0 %1404, %v600
        %v1406 = vpop.permute.xlu0 %1405
        %1408 = vset.pattern.permute.xlu0 6
        %1409 = vperm.xlu0 %1408, %v601
        %v1410 = vpop.permute.xlu0 %1409
        %v1413 = vsel %vm373, %v1402, 0
        %v1416 = vsel %vm373, %v1403, 0
        %v1419 = vsel %vm373, %v1392, 0
        %v1422 = vsel %vm373, %v1393, 0
        %v1425 = vsel %vm373, %v1394, 0
        %v1428 = vsel %vm373, %v1395, 0
        %v1431 = vsel %vm373, %v1396, 0
        %v1434 = vsel %vm373, %v1397, 0
        %v1437 = vsel %vm373, %v1398, 0
        %v1440 = vsel %vm373, %v1399, 0
        %v1443 = vsel %vm373, %v1400, 0
        %1445 = vmatprep.subr.mxu0 0.0
        %1446 = vmatpush1.xpose.msra.mxu0 0.0
        %1447 = vmatprep.subr.mxu0 0.0
        %1448 = vmatpush1.xpose.msra.mxu0 0.0
        %1449 = vmatprep.subr.mxu0 0.0
        %1450 = vmatpush1.xpose.msra.mxu0 0.0
        %1451 = vmatprep.subr.mxu0 0.0
        %1452 = vmatpush1.xpose.msra.mxu0 0.0
        %1453 = vmatprep.subr.mxu0 0.0
        %1454 = vmatpush1.xpose.msra.mxu0 0.0
        %1455 = vmatprep.subr.mxu0 0.0
        %1456 = vmatpush1.xpose.msra.mxu0 0.0
        %1457 = vmatprep.subr.mxu0 0.0
        %1458 = vmatpush1.xpose.msra.mxu0 0.0
        %1459 = vmatprep.subr.mxu0 0.0
        %1460 = vmatpush1.xpose.msra.mxu0 %v1443
        %1461 = vmatprep.subr.mxu0 0.0
        %1462 = vmatpush1.xpose.msra.mxu0 %v1440
        %1463 = vmatprep.subr.mxu0 0.0
        %1464 = vmatpush1.xpose.msra.mxu0 %v1437
        %1465 = vmatprep.subr.mxu0 0.0
        %1466 = vmatpush1.xpose.msra.mxu0 %v1434
        %1467 = vmatprep.subr.mxu0 0.0
        %1468 = vmatpush1.xpose.msra.mxu0 %v1431
        %1469 = vmatprep.subr.mxu0 0.0
        %1470 = vmatpush1.xpose.msra.mxu0 %v1428
        %1471 = vmatprep.subr.mxu0 0.0
        %1472 = vmatpush1.xpose.msra.mxu0 %v1425
        %1473 = vmatprep.subr.mxu0 0.0
        %1474 = vmatpush1.xpose.msra.mxu0 %v1422
        %1475 = vmatprep.subr.mxu0 0.0
        %1476 = vmatpush1.xpose.msra.mxu0 %v1419
        %1477 = vmatprep.subr.mxu0 0.0
        %1478 = vmatpush2.xpose.msra.mxu0 0.0
        %1479 = vmatprep.subr.mxu0 0.0
        %1480 = vmatpush2.xpose.msra.mxu0 0.0
        %1481 = vmatprep.subr.mxu0 0.0
        %1482 = vmatpush2.xpose.msra.mxu0 0.0
        %1483 = vmatprep.subr.mxu0 0.0
        %1484 = vmatpush2.xpose.msra.mxu0 0.0
        %1485 = vmatprep.subr.mxu0 0.0
        %1486 = vmatpush2.xpose.msra.mxu0 0.0
        %1487 = vmatprep.subr.mxu0 0.0
        %1488 = vmatpush2.xpose.msra.mxu0 0.0
        %1489 = vmatprep.subr.mxu0 0.0
        %1490 = vmatpush2.xpose.msra.mxu0 0.0
        %1491 = vmatprep.subr.mxu0 0.0
        %1492 = vmatpush2.xpose.msra.mxu0 0.0
        %1493 = vmatprep.subr.mxu0 0.0
        %1494 = vmatpush2.xpose.msra.mxu0 0.0
        %1495 = vmatprep.subr.mxu0 0.0
        %1496 = vmatpush2.xpose.msra.mxu0 0.0
        %1497 = vmatprep.subr.mxu0 0.0
        %1498 = vmatpush2.xpose.msra.mxu0 0.0
        %1499 = vmatprep.subr.mxu0 0.0
        %1500 = vmatpush2.xpose.msra.mxu0 0.0
        %1501 = vmatprep.subr.mxu0 0.0
        %1502 = vmatpush2.xpose.msra.mxu0 0.0
        %1503 = vmatprep.subr.mxu0 0.0
        %1504 = vmatpush2.xpose.msra.mxu0 0.0
        %1505 = vmatprep.subr.mxu0 0.0
        %1506 = vmatpush2.xpose.msra.mxu0 0.0
        %1507 = vmatprep.subr.mxu0 0.0
        %1508 = vmatpush2.xpose.msra.mxu0 0.0
        %1509 = vmatprep.mubr.f32.mxu0 0.0
        %1510 = vmatmul.mubr.f32.gmra.mxu0 %v1413
        %v1511 = vpop.f32.mrf.mxu0
        %v1512 = vadd.f32 %v1406, %v1511
        %v1513 = vpop.f32.mrf.mxu0
        %1514 = vmatprep.mubr.f32.mxu0 0.0
        %1515 = vmatmul.mubr.f32.gmra.mxu0 %v1416
        %v1516 = vpop.f32.mrf.mxu0
        %v1517 = vadd.f32 %v1410, %v1516
        %v1518 = vpop.f32.mrf.mxu0
        %1519 = vdwg.mxu0
        %v1520 = vxor.u32 %v1512, 2147483648
        %v1521 = vxor.u32 %v1517, 2147483648
        %v1522 = vmul.f32 %v1520, 1.442695
        %v1523 = vpow.pop %v1522
        %v1524 = vmul.f32 %v1521, 1.442695
        %v1525 = vpow.pop %v1524
        %v1526 = vadd.f32 %v1523, 1.0
        %v1527 = vadd.f32 %v1525, 1.0
        %v1528 = vrcp.pop %v1526
        %v1529 = vmul.f32 1.0, %v1528
        %v1530 = vrcp.pop %v1527
        %v1531 = vmul.f32 1.0, %v1530
        %v1532 = vadd.f32 %v554, 1e-12
        %v1533 = vadd.f32 %v555, 1e-12
        %v1534 = vrsqrt.pop %v1532
        %v1535 = vrsqrt.pop %v1533
        %v1536 = vmul.f32 %v1529, %v564
        %v1537 = vmul.f32 %v1531, %v571
        %v1538 = vmul.f32 %v1536, %v1534
        %v1539 = vmul.f32 %v1537, %v1535
        %v1540 = vmul.f32 %v1538, %v450
        %v1541 = vmul.f32 %v1539, %v455
        %v1544 = vrot.slane %v455, 1
        %v1545 = vrot.slane %v460, 1
        %v1546 = vsel %vm548, %v1544, %v1545
        %v1549 = vmul.f32 %v1538, %v1546
        %v1550 = vmul.f32 %v1539, %v1545
        %v1553 = vrot.slane %v1549, 7
        %v1554 = vrot.slane %v1550, 7
        %v1555 = vsel %vm606, %v1553, %v1554
        %v1557 = vsel %vm606, %v1541, %v1553
        %v1558 = vld [vmem:[#allocation4] sm:$0xff]
        %v1559 = vld [vmem:[#allocation4 + $0x8] sm:$0xff]
        %v1561 = vsel %vm709, %v1558, 0
        %v1564 = vsel %vm709, %v1559, 0
        %v1566 = vsel %vm716, %v1555, 0
        %1568 = vmatprep.subr.mxu0 0.0
        %1569 = vmatpush1.msra.mxu0 0.0
        %1570 = vmatprep.subr.mxu0 0.0
        %1571 = vmatpush1.msra.mxu0 0.0
        %1572 = vmatprep.subr.mxu0 0.0
        %1573 = vmatpush1.msra.mxu0 0.0
        %1574 = vmatprep.subr.mxu0 0.0
        %1575 = vmatpush1.msra.mxu0 0.0
        %1576 = vmatprep.subr.mxu0 0.0
        %1577 = vmatpush1.msra.mxu0 0.0
        %1578 = vmatprep.subr.mxu0 0.0
        %1579 = vmatpush1.msra.mxu0 0.0
        %1580 = vmatprep.subr.mxu0 0.0
        %1581 = vmatpush1.msra.mxu0 0.0
        %1582 = vmatprep.subr.mxu0 0.0
        %1583 = vmatpush1.msra.mxu0 0.0
        %1584 = vmatprep.subr.mxu0 0.0
        %1585 = vmatpush1.msra.mxu0 0.0
        %1586 = vmatprep.subr.mxu0 0.0
        %1587 = vmatpush1.msra.mxu0 0.0
        %1588 = vmatprep.subr.mxu0 0.0
        %1589 = vmatpush1.msra.mxu0 0.0
        %1590 = vmatprep.subr.mxu0 0.0
        %1591 = vmatpush1.msra.mxu0 0.0
        %1592 = vmatprep.subr.mxu0 0.0
        %1593 = vmatpush1.msra.mxu0 0.0
        %1594 = vmatprep.subr.mxu0 0.0
        %1595 = vmatpush1.msra.mxu0 %v1566
        %1596 = vmatprep.subr.mxu0 0.0
        %1597 = vmatpush1.msra.mxu0 %v1557
        %1598 = vmatprep.subr.mxu0 0.0
        %1599 = vmatpush1.msra.mxu0 %v1540
        %1600 = vmatprep.subr.mxu0 0.0
        %1601 = vmatpush2.msra.mxu0 0.0
        %1602 = vmatprep.subr.mxu0 0.0
        %1603 = vmatpush2.msra.mxu0 0.0
        %1604 = vmatprep.subr.mxu0 0.0
        %1605 = vmatpush2.msra.mxu0 0.0
        %1606 = vmatprep.subr.mxu0 0.0
        %1607 = vmatpush2.msra.mxu0 0.0
        %1608 = vmatprep.subr.mxu0 0.0
        %1609 = vmatpush2.msra.mxu0 0.0
        %1610 = vmatprep.subr.mxu0 0.0
        %1611 = vmatpush2.msra.mxu0 0.0
        %1612 = vmatprep.subr.mxu0 0.0
        %1613 = vmatpush2.msra.mxu0 0.0
        %1614 = vmatprep.subr.mxu0 0.0
        %1615 = vmatpush2.msra.mxu0 0.0
        %1616 = vmatprep.subr.mxu0 0.0
        %1617 = vmatpush2.msra.mxu0 0.0
        %1618 = vmatprep.subr.mxu0 0.0
        %1619 = vmatpush2.msra.mxu0 0.0
        %1620 = vmatprep.subr.mxu0 0.0
        %1621 = vmatpush2.msra.mxu0 0.0
        %1622 = vmatprep.subr.mxu0 0.0
        %1623 = vmatpush2.msra.mxu0 0.0
        %1624 = vmatprep.subr.mxu0 0.0
        %1625 = vmatpush2.msra.mxu0 0.0
        %1626 = vmatprep.subr.mxu0 0.0
        %1627 = vmatpush2.msra.mxu0 0.0
        %1628 = vmatprep.subr.mxu0 0.0
        %1629 = vmatpush2.msra.mxu0 0.0
        %1630 = vmatprep.subr.mxu0 0.0
        %1631 = vmatpush2.msra.mxu0 0.0
        %1632 = vmatprep.mubr.f32.mxu0 0.0
        %1633 = vmatmul.mubr.f32.gmra.mxu0 %v1561
        %v1634 = vpop.f32.mrf.mxu0
        %v1635 = vadd.f32 0.0, %v1634
        %v1636 = vpop.f32.mrf.mxu0
        %1637 = vmatprep.mubr.f32.mxu0 0.0
        %1638 = vmatmul.mubr.f32.gmra.mxu0 %v1564
        %v1639 = vpop.f32.mrf.mxu0
        %v1640 = vadd.f32 0.0, %v1639
        %v1641 = vpop.f32.mrf.mxu0
        %1642 = vdwg.mxu0
        %1644 = vrot.lane.b32.xlu0 %v1640, 1
        %v1645 = vpop.permute.xlu0 %1644
        %v1647 = vsel %vm867, 0.0, %v1645
        %v1648 = vsel %vm613, %v1635, 0.0
        %v1649 = vadd.f32 %v1647, %v1648
        %v1650 = vld [vmem:[#allocation7] sm:$0xff]
        %v1651 = vmul.f32 %v1649, %v1650
        %vm1652 = vcmask 539648
        %1653 = vst.msk [vmem:[%s355] sm:$0xff] %vm1652, %v1651
        %s1654 = sand.u32 %s210, 1
        %s1655 = scalar_lea.sflag [#allocation6], %s1654
        %s1656 = sand.u32 %s210, 1
        %s1657 = smul.addr %s1656, 8
        %s1658 = scalar_lea.vmem [#allocation10], %s1657
        // Predicated region
        $region72: #{tpu_custom_call.1} parent=51 // pred_check
          %p1659 = pneg %p220
        $region73: #{tpu_custom_call.1} parent=51 // pred_check_branch
          %1661 = sbr.rel (%p1659) target = $region75
        $region74: #{tpu_custom_call.1} parent=51 // pred_region
          %s1663 = ssub.s32 128, 128
          %1664 = vsyncadd %s1655, %s1663
          %s1665 = smul.addr %s24, 128
          %s1666 = scalar_lea.hbm %s8, %s1665
          %s1668 = sshll.u32 %s1658, 4
          %s1669 = int_to_ptr.vmem [resolvable:$true] %s1668
          %1671 = dma.vmem_to_hbm [thread:$0]  %s1669, 128, %s1666, %s1655
        $region75: #{tpu_custom_call.1} parent=51 // pred_fallthru
          _
      $region52: #{tpu_custom_call.1} parent=5 // pred_fallthru
        _
      %p1672 = scmp.le.s32.totalorder 2, %s19
      // Predicated region
      $region76: #{tpu_custom_call.1} parent=5 // pred_check
        %p1673 = pneg %p1672
      $region77: #{tpu_custom_call.1} parent=5 // pred_check_branch
        %1675 = sbr.rel (%p1673) target = $region79
      $region78: #{tpu_custom_call.1} parent=5 // pred_region
        %s1676 = ssub.s32 %s19, 2
        // Predicated region
        $region80: #{tpu_custom_call.1} parent=78 // pred_check
          %p1677 = pneg %p226
        $region81: #{tpu_custom_call.1} parent=78 // pred_check_branch
          %1679 = sbr.rel (%p1677) target = $region83
        $region82: #{tpu_custom_call.1} parent=78 // pred_region
          %s1680 = sand.u32 %s211, 1
          %s1681 = scalar_lea.sflag [#allocation6], %s1680
          %s1682 = sand.u32 %s211, 1
          %s1683 = smul.addr %s1682, 8
          %s1684 = scalar_lea.vmem [#allocation10], %s1683
          %1685 = dma.done %s1681, 128
        $region83: #{tpu_custom_call.1} parent=78 // pred_fallthru
          _
      $region79: #{tpu_custom_call.1} parent=5 // pred_fallthru
        _
    $region6: #{tpu_custom_call.1} parent=1 // loop_footer
      %s23 = sadd.s32 1, %s19
    $region7: #{tpu_custom_call.1} parent=1 // loop_footer_branch
      %18 = sbr.rel target = $region3
    $region8: #{tpu_custom_call.1} parent=1 // loop_exit
      _
    %1686 = vsyncpa [#allocation5], 1
    %s1687 = scalar_lea.sflag [#allocation5], 1
    %1688 = vsyncpa %s1687, 1
    %1689 = vsyncpa [#allocation8], 1
    %1690 = vsyncpa [#allocation6], 1
    %s1691 = scalar_lea.sflag [#allocation6], 1
    %1692 = vsyncpa %s1691, 1

</llo_original>
